<compile_context>
chip_gen: v7x
topology: tpu7x:2x2x1
jax: 0.10.0
libtpu: 0.0.40
codegen_flags: <defaults>
</compile_context>

<pallas_src>
import functools

import jax
import jax.numpy as jnp
from jax.experimental import pallas as pl
from jax.experimental.pallas import tpu as pltpu

NUM_FEATURES = 20
NUM_CLASSES = 5
NUM_EXPERTS = 4
EMBED_DIM = 64
DEEP_HIDDEN = 128
BN_EPS = 1e-5
LEAKY_SLOPE = 0.01

SHALLOW_COLS = NUM_EXPERTS * EMBED_DIM          # 256
DEEP_COLS = NUM_EXPERTS * DEEP_HIDDEN           # 512
GATE_COLS = 2 * NUM_EXPERTS                     # 8
FUSED_X_COLS = SHALLOW_COLS + DEEP_COLS + GATE_COLS   # 776
VMEM_LIMIT = 32 * 1024 * 1024                   # fits v5e/v6e/v7x scoped VMEM


def _gelu_exact(v):
    # nn.GELU default: 0.5 * v * (1 + erf(v / sqrt(2)))
    return 0.5 * v * (1.0 + jax.lax.erf(v * (1.0 / jnp.sqrt(2.0).astype(v.dtype))))


def _leaky_relu(v):
    return jnp.where(v > 0, v, LEAKY_SLOPE * v)


def _round_up(a, m):
    return ((a + m - 1) // m) * m


def _block_diag(blocks):
    rows = sum(b.shape[0] for b in blocks)
    cols = sum(b.shape[1] for b in blocks)
    out = jnp.zeros((rows, cols), blocks[0].dtype)
    r = c = 0
    for b in blocks:
        out = out.at[r:r + b.shape[0], c:c + b.shape[1]].set(b)
        r += b.shape[0]
        c += b.shape[1]
    return out


# ---------------------------------------------------------------------------
# Pass 1: whole-batch BatchNorm moments of GELU(x @ fc1 + b) for all experts.
# Output: (2, E*H) = [sum; sum_of_squares], accumulated over batch tiles.
# ---------------------------------------------------------------------------
def _bn_moments_kernel(x_ref, w_ref, b_ref, sums_ref, *, batch_rows, tile_rows):
    i = pl.program_id(0)

    @pl.when(i == 0)
    def _():
        sums_ref[...] = jnp.zeros_like(sums_ref)

    h = _gelu_exact(
        jnp.dot(x_ref[...], w_ref[...], preferred_element_type=jnp.float32)
        + b_ref[...]
    )
    if batch_rows % tile_rows != 0:
        # Zero out padded rows so they do not contaminate the batch statistics.
        row = jax.lax.broadcasted_iota(jnp.int32, h.shape, 0) + i * tile_rows
        h = jnp.where(row < batch_rows, h, 0.0)

    s = jnp.sum(h, axis=0, keepdims=True)
    sq = jnp.sum(h * h, axis=0, keepdims=True)
    sums_ref[...] += jnp.concatenate([s, sq], axis=0)


# ---------------------------------------------------------------------------
# Pass 2: fused MMoE forward for one batch tile.
# ---------------------------------------------------------------------------
def _mmoe_main_kernel(x_ref, wx_ref, bx_ref, scale_ref, shift_ref,
                      w2_ref, b2_ref, gw2_ref, gb2_ref,
                      rexp_ref, wt_ref, btow_ref, out_ref):
    E = NUM_EXPERTS
    s_end = SHALLOW_COLS
    d_end = SHALLOW_COLS + DEEP_COLS

    x = x_ref[...]
    # One lane-dense matmul for all shallow / deep-fc1 / gate-fc1 layers.
    z = jnp.dot(x, wx_ref[...], preferred_element_type=jnp.float32) + bx_ref[...]
    shallow = z[:, :s_end]                       # (T, 256) expert e at cols [e*64,)
    h = _gelu_exact(z[:, s_end:d_end])           # (T, 512) expert e at cols [e*128,)
    g1 = _leaky_relu(z[:, d_end:])               # (T, 8)   gate g at cols [g*4,)

    # BatchNorm1d (training mode) with global batch statistics (precomputed affine).
    hn = h * scale_ref[...] + shift_ref[...]

    # All experts' second Linear at once via block-diagonal weights.
    deep = _gelu_exact(
        jnp.dot(hn, w2_ref[...], preferred_element_type=jnp.float32) + b2_ref[...]
    )
    experts = shallow + deep                     # (T, 256) expert e at cols [e*64,)

    # Both gates' second Linear at once via block-diagonal (8, 8) weights.
    g2 = _leaky_relu(
        jnp.dot(g1, gw2_ref[...], preferred_element_type=jnp.float32) + gb2_ref[...]
    )

    def _softmax_row(v):
        m = jnp.max(v, axis=1, keepdims=True)
        p = jnp.exp(v - m)
        return p * pl.reciprocal(jnp.sum(p, axis=1, keepdims=True), approx=True)

    w_cls = _softmax_row(g2[:, :E])
    w_reg = _softmax_row(g2[:, E:])
    w_both = jnp.concatenate([w_cls, w_reg], axis=1)          # (T, 8)

    # Expand per-expert gate weights to per-lane weights ([cls(256) | reg(256)]),
    # mix, then one block-diagonal tower matmul producing a merged (T, 8) output:
    # lanes 0..4 = classification logits, lane 5 = regression prediction.
    w_exp = jnp.dot(w_both, rexp_ref[...], preferred_element_type=jnp.float32)
    mixed = w_exp * jnp.concatenate([experts, experts], axis=1)
    out = jnp.dot(mixed, wt_ref[...], preferred_element_type=jnp.float32) + btow_ref[...]
    out_ref[...] = out.astype(out_ref.dtype)


# ---------------------------------------------------------------------------
# Parameters (PyTorch Linear layout pre-transposed to (in, out)) + fusion prep.
# ---------------------------------------------------------------------------
def init_params(key):
    ks = jax.random.split(key, 16)
    s = 0.1
    F, D, H, E, C = NUM_FEATURES, EMBED_DIM, DEEP_HIDDEN, NUM_EXPERTS, NUM_CLASSES
    return dict(
        esw=jax.random.normal(ks[0], (E, F, D), jnp.float32) * s,
        esb=jax.random.normal(ks[1], (E, D), jnp.float32) * s,
        edw1=jax.random.normal(ks[2], (E, F, H), jnp.float32) * s,
        edb1=jax.random.normal(ks[3], (E, H), jnp.float32) * s,
        gamma=jnp.ones((E, H), jnp.float32) + 0.05 * jax.random.normal(ks[4], (E, H), jnp.float32),
        beta=0.05 * jax.random.normal(ks[5], (E, H), jnp.float32),
        edw2=jax.random.normal(ks[6], (E, H, D), jnp.float32) * s,
        edb2=jax.random.normal(ks[7], (E, D), jnp.float32) * s,
        gw1=jax.random.normal(ks[8], (2, F, E), jnp.float32) * s,
        gb1=jax.random.normal(ks[9], (2, E), jnp.float32) * s,
        gw2=jax.random.normal(ks[10], (2, E, E), jnp.float32) * s,
        gb2=jax.random.normal(ks[11], (2, E), jnp.float32) * s,
        tw0=jax.random.normal(ks[12], (D, C), jnp.float32) * s,
        tb0=jax.random.normal(ks[13], (1, C), jnp.float32) * s,
        tw1=jax.random.normal(ks[14], (D, 1), jnp.float32) * s,
        tb1=jax.random.normal(ks[15], (1, 1), jnp.float32) * s,
    )


def prepare_fused_params(p):
    """Build fused / block-diagonal weight matrices once (outside the hot path)."""
    F, D, H, E, C = NUM_FEATURES, EMBED_DIM, DEEP_HIDDEN, NUM_EXPERTS, NUM_CLASSES
    shallow_w = jnp.transpose(p["esw"], (1, 0, 2)).reshape(F, E * D)    # (20, 256)
    deep1_w = jnp.transpose(p["edw1"], (1, 0, 2)).reshape(F, E * H)     # (20, 512)
    gate1_w = jnp.transpose(p["gw1"], (1, 0, 2)).reshape(F, 2 * E)      # (20, 8)
    wx = jnp.concatenate([shallow_w, deep1_w, gate1_w], axis=1)         # (20, 776)
    bx = jnp.concatenate([p["esb"].reshape(1, E * D),
                          p["edb1"].reshape(1, E * H),
                          p["gb1"].reshape(1, 2 * E)], axis=1)          # (1, 776)

    w2 = _block_diag([p["edw2"][e] for e in range(E)])                  # (512, 256)
    b2 = p["edb2"].reshape(1, E * D)                                    # (1, 256)

    gw2 = _block_diag([p["gw2"][0], p["gw2"][1]])                       # (8, 8)
    gb2 = p["gb2"].reshape(1, 2 * E)                                    # (1, 8)

    # Gate-weight lane expansion: (8, 512) block-diag of [kron(I4, ones(1,64))] x2.
    r_gate = jnp.kron(jnp.eye(E, dtype=jnp.float32), jnp.ones((1, D), jnp.float32))
    rexp = _block_diag([r_gate, r_gate])                                # (8, 512)

    # Fused towers: rows [0,256) -> classify (cols 0..4), rows [256,512) -> regress (col 5).
    wt = jnp.zeros((2 * E * D, 8), jnp.float32)
    wt = wt.at[:E * D, :C].set(jnp.tile(p["tw0"], (E, 1)))
    wt = wt.at[E * D:, C:C + 1].set(jnp.tile(p["tw1"], (E, 1)))
    btow = jnp.zeros((1, 8), jnp.float32)
    btow = btow.at[:, :C].set(p["tb0"])
    btow = btow.at[:, C:C + 1].set(p["tb1"])

    return dict(wx=wx, bx=bx,
                w_d1=deep1_w, b_d1=p["edb1"].reshape(1, E * H),
                gamma=p["gamma"].reshape(1, E * H), beta=p["beta"].reshape(1, E * H),
                w2=w2, b2=b2, gw2=gw2, gb2=gb2, rexp=rexp, wt=wt, btow=btow)


# ---------------------------------------------------------------------------
# Forward wrapper: two pallas_calls (BN moments pass + fused main pass).
# ---------------------------------------------------------------------------
@jax.jit
def mmoe_forward(x, fp):
    B = x.shape[0]
    F, D, H, E, C = NUM_FEATURES, EMBED_DIM, DEEP_HIDDEN, NUM_EXPERTS, NUM_CLASSES

    tile = min(256, _round_up(B, 8))     # f32 sublane aligned, VMEM-safe on v7x
    nb = -(-B // tile)
    b_pad = nb * tile
    x_p = x if b_pad == B else jnp.pad(x, ((0, b_pad - B), (0, 0)))

    # ---- Pass 1: global BatchNorm moments (training-mode semantics preserved). ----
    sums = pl.pallas_call(
        functools.partial(_bn_moments_kernel, batch_rows=B, tile_rows=tile),
        out_shape=jax.ShapeDtypeStruct((2, E * H), jnp.float32),
        grid=(nb,),
        in_specs=[
            pl.BlockSpec((tile, F), lambda i: (i, 0)),
            pl.BlockSpec((F, E * H), lambda i: (0, 0)),
            pl.BlockSpec((1, E * H), lambda i: (0, 0)),
        ],
        out_specs=pl.BlockSpec((2, E * H), lambda i: (0, 0)),
        compiler_params=pltpu.CompilerParams(
            dimension_semantics=("arbitrary",),
            vmem_limit_bytes=VMEM_LIMIT),
    )(x_p, fp["w_d1"], fp["b_d1"])

    mean = sums[0:1, :] / B
    var = jnp.maximum(sums[1:2, :] / B - mean * mean, 0.0)     # biased variance
    rstd = jax.lax.rsqrt(var + BN_EPS)
    scale = fp["gamma"] * rstd
    shift = fp["beta"] - mean * scale

    # ---- Pass 2: fused forward, batch-parallel grid, merged (B, 8) output. ----
    out8 = pl.pallas_call(
        _mmoe_main_kernel,
        out_shape=jax.ShapeDtypeStruct((b_pad, 8), jnp.float32),
        grid=(nb,),
        in_specs=[
            pl.BlockSpec((tile, F), lambda i: (i, 0)),               # x
            pl.BlockSpec((F, FUSED_X_COLS), lambda i: (0, 0)),       # fused x-weights
            pl.BlockSpec((1, FUSED_X_COLS), lambda i: (0, 0)),       # fused x-bias
            pl.BlockSpec((1, E * H), lambda i: (0, 0)),              # BN scale
            pl.BlockSpec((1, E * H), lambda i: (0, 0)),              # BN shift
            pl.BlockSpec((E * H, E * D), lambda i: (0, 0)),          # block-diag fc2
            pl.BlockSpec((1, E * D), lambda i: (0, 0)),              # fc2 bias
            pl.BlockSpec((2 * E, 2 * E), lambda i: (0, 0)),          # block-diag gate fc2
            pl.BlockSpec((1, 2 * E), lambda i: (0, 0)),              # gate fc2 bias
            pl.BlockSpec((2 * E, 2 * E * D), lambda i: (0, 0)),      # gate-weight expander
            pl.BlockSpec((2 * E * D, 8), lambda i: (0, 0)),          # fused towers
            pl.BlockSpec((1, 8), lambda i: (0, 0)),                  # fused tower bias
        ],
        out_specs=pl.BlockSpec((tile, 8), lambda i: (i, 0)),
        compiler_params=pltpu.CompilerParams(
            dimension_semantics=("parallel",),
            vmem_limit_bytes=VMEM_LIMIT),
    )(x_p, fp["wx"], fp["bx"], scale, shift, fp["w2"], fp["b2"],
      fp["gw2"], fp["gb2"], fp["rexp"], fp["wt"], fp["btow"])

    logit = out8[:B, :C]
    pred = out8[:B, C:C + 1]
    return logit, pred


# ---------------------------------------------------------------------------
# Pure-JAX reference (identical semantics) for correctness checking.
# ---------------------------------------------------------------------------
def mmoe_reference(x, p):
    expert_outs = []
    for e in range(NUM_EXPERTS):
        shallow = x @ p["esw"][e] + p["esb"][e]
        h = _gelu_exact(x @ p["edw1"][e] + p["edb1"][e])
        mean = jnp.mean(h, axis=0, keepdims=True)
        var = jnp.mean((h - mean) ** 2, axis=0, keepdims=True)
        h = (h - mean) / jnp.sqrt(var + BN_EPS) * p["gamma"][e] + p["beta"][e]
        d = _gelu_exact(h @ p["edw2"][e] + p["edb2"][e])
        expert_outs.append(shallow + d)
    shared = jnp.stack(expert_outs, axis=1)  # (B, E, D)

    def gate(g):
        h1 = _leaky_relu(x @ p["gw1"][g] + p["gb1"][g])
        h2 = _leaky_relu(h1 @ p["gw2"][g] + p["gb2"][g])
        return jax.nn.softmax(h2, axis=1)

    w_cls = gate(0)[:, :, None]
    w_reg = gate(1)[:, :, None]
    cls_emb = jnp.sum(w_cls * shared, axis=1)
    reg_emb = jnp.sum(w_reg * shared, axis=1)
    logit = cls_emb @ p["tw0"] + p["tb0"]
    pred = reg_emb @ p["tw1"] + p["tb1"]
    return logit, pred


if __name__ == "__main__":
    key = jax.random.PRNGKey(0)
    kp, kx1, kx2 = jax.random.split(key, 3)
    raw = init_params(kp)
    fused = prepare_fused_params(raw)

    for B in (8, 12):   # 12 exercises the batch-padding / BN-masking path
        x = jax.random.normal(jax.random.fold_in(kx1, B), (B, NUM_FEATURES), jnp.float32)
        logit, pred = mmoe_forward(x, fused)
        jax.block_until_ready((logit, pred))

        ref_logit, ref_pred = mmoe_reference(x, raw)
        assert logit.shape == (B, NUM_CLASSES) and pred.shape == (B, 1)
        assert jnp.allclose(logit, ref_logit, rtol=1e-3, atol=1e-3), \
            f"logit mismatch at B={B}: {jnp.max(jnp.abs(logit - ref_logit))}"
        assert jnp.allclose(pred, ref_pred, rtol=1e-3, atol=1e-3), \
            f"pred mismatch at B={B}: {jnp.max(jnp.abs(pred - ref_pred))}"

    print("KERNEL_OK")
</pallas_src>

<mosaic_0001>
module attributes {stable_mosaic.version = 11 : i64} {
  func.func @_bn_moments_kernel(%arg0: i32, %arg1: memref<8x20xf32, #tpu.memory_space<vmem>>, %arg2: memref<20x512xf32, #tpu.memory_space<vmem>>, %arg3: memref<1x512xf32, #tpu.memory_space<vmem>>, %arg4: memref<2x512xf32, #tpu.memory_space<vmem>>) attributes {dimension_semantics = [#tpu.dimension_semantics<arbitrary>], iteration_bounds = array<i64: 1>, scalar_prefetch = 0 : i64, scratch_operands = 0 : i64, tpu.core_type = #tpu.core_type<tc>, window_params = [{transform_indices = @transform_0, window_bounds = array<i64: 8, 20>}, {pipeline_mode = #tpu.pipeline_mode<synchronous>, transform_indices = @transform_1, window_bounds = array<i64: 20, 512>}, {pipeline_mode = #tpu.pipeline_mode<synchronous>, transform_indices = @transform_2, window_bounds = array<i64: 1, 512>}, {pipeline_mode = #tpu.pipeline_mode<synchronous>, transform_indices = @transform_3, window_bounds = array<i64: 2, 512>}]} {
    %c0_i32 = arith.constant 0 : i32
    %0 = arith.cmpi eq, %arg0, %c0_i32 : i32
    %1 = arith.extui %0 : i1 to i32
    %c0_i32_0 = arith.constant 0 : i32
    %2 = arith.cmpi ne, %1, %c0_i32_0 : i32
    scf.if %2 {
      %cst_16 = arith.constant 0.000000e+00 : f32
      %28 = vector.broadcast %cst_16 : f32 to vector<2x512xf32>
      %c0_17 = arith.constant 0 : index
      %c0_18 = arith.constant 0 : index
      %29 = vector.load %arg4[%c0_17, %c0_18] : memref<2x512xf32, #tpu.memory_space<vmem>>, vector<2x512xf32>
      tpu.vector_store %arg4[%c0_17, %c0_18], %28 {strides = array<i32>} : memref<2x512xf32, #tpu.memory_space<vmem>>, vector<2x512xf32>,
    } else {
    }
    %c0 = arith.constant 0 : index
    %c0_1 = arith.constant 0 : index
    %3 = vector.load %arg1[%c0, %c0_1] : memref<8x20xf32, #tpu.memory_space<vmem>>, vector<8x20xf32>
    %c0_2 = arith.constant 0 : index
    %c0_3 = arith.constant 0 : index
    %4 = vector.load %arg2[%c0_2, %c0_3] : memref<20x512xf32, #tpu.memory_space<vmem>>, vector<20x512xf32>
    %cst = arith.constant dense<0.000000e+00> : vector<8x512xf32>
    %5 = tpu.matmul %3, %4, %cst {dimension_numbers = #tpu.dot_dimension_numbers<[1], [0], [0], [1], [0, 0, 1, 1], [], []>} : vector<8x20xf32>, vector<20x512xf32>, vector<8x512xf32> -> vector<8x512xf32>
    %c0_4 = arith.constant 0 : index
    %c0_5 = arith.constant 0 : index
    %6 = vector.load %arg3[%c0_4, %c0_5] : memref<1x512xf32, #tpu.memory_space<vmem>>, vector<1x512xf32>
    %7 = vector.broadcast %6 : vector<1x512xf32> to vector<8x512xf32>
    %8 = arith.addf %5, %7 : vector<8x512xf32>
    %cst_6 = arith.constant 5.000000e-01 : f32
    %9 = vector.broadcast %cst_6 : f32 to vector<8x512xf32>
    %10 = arith.mulf %9, %8 : vector<8x512xf32>
    %cst_7 = arith.constant 2.000000e+00 : f32
    %11 = math.sqrt %cst_7 : f32
    %cst_8 = arith.constant 1.000000e+00 : f32
    %12 = arith.divf %cst_8, %11 : f32
    %13 = vector.broadcast %12 : f32 to vector<8x512xf32>
    %14 = arith.mulf %8, %13 : vector<8x512xf32>
    %15 = math.erf %14 : vector<8x512xf32>
    %cst_9 = arith.constant 1.000000e+00 : f32
    %16 = vector.broadcast %cst_9 : f32 to vector<8x512xf32>
    %17 = arith.addf %16, %15 : vector<8x512xf32>
    %18 = arith.mulf %10, %17 : vector<8x512xf32>
    %cst_10 = arith.constant dense<0.000000e+00> : vector<512xf32>
    %19 = vector.multi_reduction <add>, %18, %cst_10 [0] : vector<8x512xf32> to vector<512xf32>
    %20 = vector.shape_cast %19 : vector<512xf32> to vector<1x512xf32>
    %21 = arith.mulf %18, %18 : vector<8x512xf32>
    %cst_11 = arith.constant dense<0.000000e+00> : vector<512xf32>
    %22 = vector.multi_reduction <add>, %21, %cst_11 [0] : vector<8x512xf32> to vector<512xf32>
    %23 = vector.shape_cast %22 : vector<512xf32> to vector<1x512xf32>
    %c0_12 = arith.constant 0 : index
    %c0_13 = arith.constant 0 : index
    %24 = vector.load %arg4[%c0_12, %c0_13] : memref<2x512xf32, #tpu.memory_space<vmem>>, vector<2x512xf32>
    %25 = tpu.concatenate %20, %23 in 0 : vector<1x512xf32>, vector<1x512xf32> -> vector<2x512xf32>
    %26 = arith.addf %24, %25 : vector<2x512xf32>
    %c0_14 = arith.constant 0 : index
    %c0_15 = arith.constant 0 : index
    %27 = vector.load %arg4[%c0_14, %c0_15] : memref<2x512xf32, #tpu.memory_space<vmem>>, vector<2x512xf32>
    tpu.vector_store %arg4[%c0_14, %c0_15], %26 {strides = array<i32>} : memref<2x512xf32, #tpu.memory_space<vmem>>, vector<2x512xf32>,
    return
  }
  func.func @transform_0(%arg0: i32) -> (i32, i32) {
    %c0_i32 = arith.constant 0 : i32
    %c0_i32_0 = arith.constant 0 : i32
    return %arg0, %c0_i32 : i32, i32
  }
  func.func @transform_1(%arg0: i32) -> (i32, i32) {
    %c0_i32 = arith.constant 0 : i32
    %c0_i32_0 = arith.constant 0 : i32
    %c0_i32_1 = arith.constant 0 : i32
    return %c0_i32, %c0_i32_0 : i32, i32
  }
  func.func @transform_2(%arg0: i32) -> (i32, i32) {
    %c0_i32 = arith.constant 0 : i32
    %c0_i32_0 = arith.constant 0 : i32
    %c0_i32_1 = arith.constant 0 : i32
    return %c0_i32, %c0_i32_0 : i32, i32
  }
  func.func @transform_3(%arg0: i32) -> (i32, i32) {
    %c0_i32 = arith.constant 0 : i32
    %c0_i32_0 = arith.constant 0 : i32
    %c0_i32_1 = arith.constant 0 : i32
    return %c0_i32, %c0_i32_0 : i32, i32
  }
}

module attributes {stable_mosaic.version = 11 : i64} {
  func.func @_mmoe_main_kernel(%arg0: i32, %arg1: memref<8x20xf32, #tpu.memory_space<vmem>>, %arg2: memref<20x776xf32, #tpu.memory_space<vmem>>, %arg3: memref<1x776xf32, #tpu.memory_space<vmem>>, %arg4: memref<1x512xf32, #tpu.memory_space<vmem>>, %arg5: memref<1x512xf32, #tpu.memory_space<vmem>>, %arg6: memref<512x256xf32, #tpu.memory_space<vmem>>, %arg7: memref<1x256xf32, #tpu.memory_space<vmem>>, %arg8: memref<8x8xf32, #tpu.memory_space<vmem>>, %arg9: memref<1x8xf32, #tpu.memory_space<vmem>>, %arg10: memref<8x512xf32, #tpu.memory_space<vmem>>, %arg11: memref<512x8xf32, #tpu.memory_space<vmem>>, %arg12: memref<1x8xf32, #tpu.memory_space<vmem>>, %arg13: memref<8x8xf32, #tpu.memory_space<vmem>>) attributes {dimension_semantics = [#tpu.dimension_semantics<parallel>], iteration_bounds = array<i64: 1>, scalar_prefetch = 0 : i64, scratch_operands = 0 : i64, tpu.core_type = #tpu.core_type<tc>, window_params = [{transform_indices = @transform_0, window_bounds = array<i64: 8, 20>}, {pipeline_mode = #tpu.pipeline_mode<synchronous>, transform_indices = @transform_1, window_bounds = array<i64: 20, 776>}, {pipeline_mode = #tpu.pipeline_mode<synchronous>, transform_indices = @transform_2, window_bounds = array<i64: 1, 776>}, {pipeline_mode = #tpu.pipeline_mode<synchronous>, transform_indices = @transform_3, window_bounds = array<i64: 1, 512>}, {pipeline_mode = #tpu.pipeline_mode<synchronous>, transform_indices = @transform_4, window_bounds = array<i64: 1, 512>}, {pipeline_mode = #tpu.pipeline_mode<synchronous>, transform_indices = @transform_5, window_bounds = array<i64: 512, 256>}, {pipeline_mode = #tpu.pipeline_mode<synchronous>, transform_indices = @transform_6, window_bounds = array<i64: 1, 256>}, {pipeline_mode = #tpu.pipeline_mode<synchronous>, transform_indices = @transform_7, window_bounds = array<i64: 8, 8>}, {pipeline_mode = #tpu.pipeline_mode<synchronous>, transform_indices = @transform_8, window_bounds = array<i64: 1, 8>}, {pipeline_mode = #tpu.pipeline_mode<synchronous>, transform_indices = @transform_9, window_bounds = array<i64: 8, 512>}, {pipeline_mode = #tpu.pipeline_mode<synchronous>, transform_indices = @transform_10, window_bounds = array<i64: 512, 8>}, {pipeline_mode = #tpu.pipeline_mode<synchronous>, transform_indices = @transform_11, window_bounds = array<i64: 1, 8>}, {transform_indices = @transform_12, window_bounds = array<i64: 8, 8>}]} {
    %c0 = arith.constant 0 : index
    %c0_0 = arith.constant 0 : index
    %0 = vector.load %arg1[%c0, %c0_0] : memref<8x20xf32, #tpu.memory_space<vmem>>, vector<8x20xf32>
    %c0_1 = arith.constant 0 : index
    %c0_2 = arith.constant 0 : index
    %1 = vector.load %arg2[%c0_1, %c0_2] : memref<20x776xf32, #tpu.memory_space<vmem>>, vector<20x776xf32>
    %cst = arith.constant dense<0.000000e+00> : vector<8x776xf32>
    %2 = tpu.matmul %0, %1, %cst {dimension_numbers = #tpu.dot_dimension_numbers<[1], [0], [0], [1], [0, 0, 1, 1], [], []>} : vector<8x20xf32>, vector<20x776xf32>, vector<8x776xf32> -> vector<8x776xf32>
    %c0_3 = arith.constant 0 : index
    %c0_4 = arith.constant 0 : index
    %3 = vector.load %arg3[%c0_3, %c0_4] : memref<1x776xf32, #tpu.memory_space<vmem>>, vector<1x776xf32>
    %4 = vector.broadcast %3 : vector<1x776xf32> to vector<8x776xf32>
    %5 = arith.addf %2, %4 : vector<8x776xf32>
    %6 = vector.extract_strided_slice %5 {offsets = [0, 0], sizes = [8, 256], strides = [1, 1]} : vector<8x776xf32> to vector<8x256xf32>
    %7 = vector.extract_strided_slice %5 {offsets = [0, 256], sizes = [8, 512], strides = [1, 1]} : vector<8x776xf32> to vector<8x512xf32>
    %cst_5 = arith.constant 5.000000e-01 : f32
    %8 = vector.broadcast %cst_5 : f32 to vector<8x512xf32>
    %9 = arith.mulf %8, %7 : vector<8x512xf32>
    %cst_6 = arith.constant 2.000000e+00 : f32
    %10 = math.sqrt %cst_6 : f32
    %cst_7 = arith.constant 1.000000e+00 : f32
    %11 = arith.divf %cst_7, %10 : f32
    %12 = vector.broadcast %11 : f32 to vector<8x512xf32>
    %13 = arith.mulf %7, %12 : vector<8x512xf32>
    %14 = math.erf %13 : vector<8x512xf32>
    %cst_8 = arith.constant 1.000000e+00 : f32
    %15 = vector.broadcast %cst_8 : f32 to vector<8x512xf32>
    %16 = arith.addf %15, %14 : vector<8x512xf32>
    %17 = arith.mulf %9, %16 : vector<8x512xf32>
    %18 = vector.extract_strided_slice %5 {offsets = [0, 768], sizes = [8, 8], strides = [1, 1]} : vector<8x776xf32> to vector<8x8xf32>
    %cst_9 = arith.constant 0.000000e+00 : f32
    %19 = vector.broadcast %cst_9 : f32 to vector<8x8xf32>
    %20 = arith.cmpf ogt, %18, %19 : vector<8x8xf32>
    %cst_10 = arith.constant 0.00999999977 : f32
    %21 = vector.broadcast %cst_10 : f32 to vector<8x8xf32>
    %22 = arith.mulf %21, %18 : vector<8x8xf32>
    %23 = arith.select %20, %18, %22 : vector<8x8xi1>, vector<8x8xf32>
    %c0_11 = arith.constant 0 : index
    %c0_12 = arith.constant 0 : index
    %24 = vector.load %arg4[%c0_11, %c0_12] : memref<1x512xf32, #tpu.memory_space<vmem>>, vector<1x512xf32>
    %25 = vector.broadcast %24 : vector<1x512xf32> to vector<8x512xf32>
    %26 = arith.mulf %17, %25 : vector<8x512xf32>
    %c0_13 = arith.constant 0 : index
    %c0_14 = arith.constant 0 : index
    %27 = vector.load %arg5[%c0_13, %c0_14] : memref<1x512xf32, #tpu.memory_space<vmem>>, vector<1x512xf32>
    %28 = vector.broadcast %27 : vector<1x512xf32> to vector<8x512xf32>
    %29 = arith.addf %26, %28 : vector<8x512xf32>
    %c0_15 = arith.constant 0 : index
    %c0_16 = arith.constant 0 : index
    %30 = vector.load %arg6[%c0_15, %c0_16] : memref<512x256xf32, #tpu.memory_space<vmem>>, vector<512x256xf32>
    %cst_17 = arith.constant dense<0.000000e+00> : vector<8x256xf32>
    %31 = tpu.matmul %29, %30, %cst_17 {dimension_numbers = #tpu.dot_dimension_numbers<[1], [0], [0], [1], [0, 0, 1, 1], [], []>} : vector<8x512xf32>, vector<512x256xf32>, vector<8x256xf32> -> vector<8x256xf32>
    %c0_18 = arith.constant 0 : index
    %c0_19 = arith.constant 0 : index
    %32 = vector.load %arg7[%c0_18, %c0_19] : memref<1x256xf32, #tpu.memory_space<vmem>>, vector<1x256xf32>
    %33 = vector.broadcast %32 : vector<1x256xf32> to vector<8x256xf32>
    %34 = arith.addf %31, %33 : vector<8x256xf32>
    %cst_20 = arith.constant 5.000000e-01 : f32
    %35 = vector.broadcast %cst_20 : f32 to vector<8x256xf32>
    %36 = arith.mulf %35, %34 : vector<8x256xf32>
    %cst_21 = arith.constant 2.000000e+00 : f32
    %37 = math.sqrt %cst_21 : f32
    %cst_22 = arith.constant 1.000000e+00 : f32
    %38 = arith.divf %cst_22, %37 : f32
    %39 = vector.broadcast %38 : f32 to vector<8x256xf32>
    %40 = arith.mulf %34, %39 : vector<8x256xf32>
    %41 = math.erf %40 : vector<8x256xf32>
    %cst_23 = arith.constant 1.000000e+00 : f32
    %42 = vector.broadcast %cst_23 : f32 to vector<8x256xf32>
    %43 = arith.addf %42, %41 : vector<8x256xf32>
    %44 = arith.mulf %36, %43 : vector<8x256xf32>
    %45 = arith.addf %6, %44 : vector<8x256xf32>
    %c0_24 = arith.constant 0 : index
    %c0_25 = arith.constant 0 : index
    %46 = vector.load %arg8[%c0_24, %c0_25] : memref<8x8xf32, #tpu.memory_space<vmem>>, vector<8x8xf32>
    %cst_26 = arith.constant dense<0.000000e+00> : vector<8x8xf32>
    %47 = tpu.matmul %23, %46, %cst_26 {dimension_numbers = #tpu.dot_dimension_numbers<[1], [0], [0], [1], [0, 0, 1, 1], [], []>} : vector<8x8xf32>, vector<8x8xf32>, vector<8x8xf32> -> vector<8x8xf32>
    %c0_27 = arith.constant 0 : index
    %c0_28 = arith.constant 0 : index
    %48 = vector.load %arg9[%c0_27, %c0_28] : memref<1x8xf32, #tpu.memory_space<vmem>>, vector<1x8xf32>
    %49 = vector.broadcast %48 : vector<1x8xf32> to vector<8x8xf32>
    %50 = arith.addf %47, %49 : vector<8x8xf32>
    %cst_29 = arith.constant 0.000000e+00 : f32
    %51 = vector.broadcast %cst_29 : f32 to vector<8x8xf32>
    %52 = arith.cmpf ogt, %50, %51 : vector<8x8xf32>
    %cst_30 = arith.constant 0.00999999977 : f32
    %53 = vector.broadcast %cst_30 : f32 to vector<8x8xf32>
    %54 = arith.mulf %53, %50 : vector<8x8xf32>
    %55 = arith.select %52, %50, %54 : vector<8x8xi1>, vector<8x8xf32>
    %56 = vector.extract_strided_slice %55 {offsets = [0, 0], sizes = [8, 4], strides = [1, 1]} : vector<8x8xf32> to vector<8x4xf32>
    %cst_31 = arith.constant dense<0xFF800000> : vector<8xf32>
    %57 = vector.multi_reduction <maximumf>, %56, %cst_31 [1] : vector<8x4xf32> to vector<8xf32>
    %58 = vector.shape_cast %57 : vector<8xf32> to vector<8x1xf32>
    %59 = vector.broadcast %58 : vector<8x1xf32> to vector<8x4xf32>
    %60 = arith.subf %56, %59 : vector<8x4xf32>
    %61 = math.exp %60 : vector<8x4xf32>
    %cst_32 = arith.constant dense<0.000000e+00> : vector<8xf32>
    %62 = vector.multi_reduction <add>, %61, %cst_32 [1] : vector<8x4xf32> to vector<8xf32>
    %63 = vector.shape_cast %62 : vector<8xf32> to vector<8x1xf32>
    %64 = tpu.reciprocal %63 {approx = true} : vector<8x1xf32> -> vector<8x1xf32>
    %65 = vector.broadcast %64 : vector<8x1xf32> to vector<8x4xf32>
    %66 = arith.mulf %61, %65 : vector<8x4xf32>
    %67 = vector.extract_strided_slice %55 {offsets = [0, 4], sizes = [8, 4], strides = [1, 1]} : vector<8x8xf32> to vector<8x4xf32>
    %cst_33 = arith.constant dense<0xFF800000> : vector<8xf32>
    %68 = vector.multi_reduction <maximumf>, %67, %cst_33 [1] : vector<8x4xf32> to vector<8xf32>
    %69 = vector.shape_cast %68 : vector<8xf32> to vector<8x1xf32>
    %70 = vector.broadcast %69 : vector<8x1xf32> to vector<8x4xf32>
    %71 = arith.subf %67, %70 : vector<8x4xf32>
    %72 = math.exp %71 : vector<8x4xf32>
    %cst_34 = arith.constant dense<0.000000e+00> : vector<8xf32>
    %73 = vector.multi_reduction <add>, %72, %cst_34 [1] : vector<8x4xf32> to vector<8xf32>
    %74 = vector.shape_cast %73 : vector<8xf32> to vector<8x1xf32>
    %75 = tpu.reciprocal %74 {approx = true} : vector<8x1xf32> -> vector<8x1xf32>
    %76 = vector.broadcast %75 : vector<8x1xf32> to vector<8x4xf32>
    %77 = arith.mulf %72, %76 : vector<8x4xf32>
    %78 = tpu.concatenate %66, %77 in 1 : vector<8x4xf32>, vector<8x4xf32> -> vector<8x8xf32>
    %c0_35 = arith.constant 0 : index
    %c0_36 = arith.constant 0 : index
    %79 = vector.load %arg10[%c0_35, %c0_36] : memref<8x512xf32, #tpu.memory_space<vmem>>, vector<8x512xf32>
    %cst_37 = arith.constant dense<0.000000e+00> : vector<8x512xf32>
    %80 = tpu.matmul %78, %79, %cst_37 {dimension_numbers = #tpu.dot_dimension_numbers<[1], [0], [0], [1], [0, 0, 1, 1], [], []>} : vector<8x8xf32>, vector<8x512xf32>, vector<8x512xf32> -> vector<8x512xf32>
    %81 = tpu.concatenate %45, %45 in 1 : vector<8x256xf32>, vector<8x256xf32> -> vector<8x512xf32>
    %82 = arith.mulf %80, %81 : vector<8x512xf32>
    %c0_38 = arith.constant 0 : index
    %c0_39 = arith.constant 0 : index
    %83 = vector.load %arg11[%c0_38, %c0_39] : memref<512x8xf32, #tpu.memory_space<vmem>>, vector<512x8xf32>
    %cst_40 = arith.constant dense<0.000000e+00> : vector<8x8xf32>
    %84 = tpu.matmul %82, %83, %cst_40 {dimension_numbers = #tpu.dot_dimension_numbers<[1], [0], [0], [1], [0, 0, 1, 1], [], []>} : vector<8x512xf32>, vector<512x8xf32>, vector<8x8xf32> -> vector<8x8xf32>
    %c0_41 = arith.constant 0 : index
    %c0_42 = arith.constant 0 : index
    %85 = vector.load %arg12[%c0_41, %c0_42] : memref<1x8xf32, #tpu.memory_space<vmem>>, vector<1x8xf32>
    %86 = vector.broadcast %85 : vector<1x8xf32> to vector<8x8xf32>
    %87 = arith.addf %84, %86 : vector<8x8xf32>
    %c0_43 = arith.constant 0 : index
    %c0_44 = arith.constant 0 : index
    %88 = vector.load %arg13[%c0_43, %c0_44] : memref<8x8xf32, #tpu.memory_space<vmem>>, vector<8x8xf32>
    tpu.vector_store %arg13[%c0_43, %c0_44], %87 {strides = array<i32>} : memref<8x8xf32, #tpu.memory_space<vmem>>, vector<8x8xf32>,
    return
  }
  func.func @transform_0(%arg0: i32) -> (i32, i32) {
    %c0_i32 = arith.constant 0 : i32
    %c0_i32_0 = arith.constant 0 : i32
    return %arg0, %c0_i32 : i32, i32
  }
  func.func @transform_1(%arg0: i32) -> (i32, i32) {
    %c0_i32 = arith.constant 0 : i32
    %c0_i32_0 = arith.constant 0 : i32
    %c0_i32_1 = arith.constant 0 : i32
    return %c0_i32, %c0_i32_0 : i32, i32
  }
  func.func @transform_2(%arg0: i32) -> (i32, i32) {
    %c0_i32 = arith.constant 0 : i32
    %c0_i32_0 = arith.constant 0 : i32
    %c0_i32_1 = arith.constant 0 : i32
    return %c0_i32, %c0_i32_0 : i32, i32
  }
  func.func @transform_3(%arg0: i32) -> (i32, i32) {
    %c0_i32 = arith.constant 0 : i32
    %c0_i32_0 = arith.constant 0 : i32
    %c0_i32_1 = arith.constant 0 : i32
    return %c0_i32, %c0_i32_0 : i32, i32
  }
  func.func @transform_4(%arg0: i32) -> (i32, i32) {
    %c0_i32 = arith.constant 0 : i32
    %c0_i32_0 = arith.constant 0 : i32
    %c0_i32_1 = arith.constant 0 : i32
    return %c0_i32, %c0_i32_0 : i32, i32
  }
  func.func @transform_5(%arg0: i32) -> (i32, i32) {
    %c0_i32 = arith.constant 0 : i32
    %c0_i32_0 = arith.constant 0 : i32
    %c0_i32_1 = arith.constant 0 : i32
    return %c0_i32, %c0_i32_0 : i32, i32
  }
  func.func @transform_6(%arg0: i32) -> (i32, i32) {
    %c0_i32 = arith.constant 0 : i32
    %c0_i32_0 = arith.constant 0 : i32
    %c0_i32_1 = arith.constant 0 : i32
    return %c0_i32, %c0_i32_0 : i32, i32
  }
  func.func @transform_7(%arg0: i32) -> (i32, i32) {
    %c0_i32 = arith.constant 0 : i32
    %c0_i32_0 = arith.constant 0 : i32
    %c0_i32_1 = arith.constant 0 : i32
    return %c0_i32, %c0_i32_0 : i32, i32
  }
  func.func @transform_8(%arg0: i32) -> (i32, i32) {
    %c0_i32 = arith.constant 0 : i32
    %c0_i32_0 = arith.constant 0 : i32
    %c0_i32_1 = arith.constant 0 : i32
    return %c0_i32, %c0_i32_0 : i32, i32
  }
  func.func @transform_9(%arg0: i32) -> (i32, i32) {
    %c0_i32 = arith.constant 0 : i32
    %c0_i32_0 = arith.constant 0 : i32
    %c0_i32_1 = arith.constant 0 : i32
    return %c0_i32, %c0_i32_0 : i32, i32
  }
  func.func @transform_10(%arg0: i32) -> (i32, i32) {
    %c0_i32 = arith.constant 0 : i32
    %c0_i32_0 = arith.constant 0 : i32
    %c0_i32_1 = arith.constant 0 : i32
    return %c0_i32, %c0_i32_0 : i32, i32
  }
  func.func @transform_11(%arg0: i32) -> (i32, i32) {
    %c0_i32 = arith.constant 0 : i32
    %c0_i32_0 = arith.constant 0 : i32
    %c0_i32_1 = arith.constant 0 : i32
    return %c0_i32, %c0_i32_0 : i32, i32
  }
  func.func @transform_12(%arg0: i32) -> (i32, i32) {
    %c0_i32 = arith.constant 0 : i32
    %c0_i32_0 = arith.constant 0 : i32
    return %arg0, %c0_i32 : i32, i32
  }
}

</mosaic_0001>

<llo_original>
// kernel: mmoe_forward.2
$region0: #{mmoe_forward.2}
  #allocation0 [shape = 'u32[]', space=smem, size = 0x4, offset = 0x4, fixed_abs, tag = 'smem constant byte address 0x4 - core index']
  #allocation1 [shape = 'u32[144,128]{1,0:T(1,128)}', space=vmem, size = 0x12000, scoped, tag = 'internal scratch']
  %s0 = inlined_call_operand.vmem [shape: f32[8,20], index: 0, kind: input, shape index: {}]
  %s1 = inlined_call_operand.hbm [shape: f32[20,512], index: 1, kind: input, shape index: {}]
  %s2 = inlined_call_operand.hbm [shape: f32[1,512], index: 2, kind: input, shape index: {}]
  %s3 = inlined_call_operand.vmem [shape: f32[2,512], index: 3, kind: output, shape index: {}]
  %s4 = sld [smem:[#allocation0]]
  $region34: #{mmoe_forward.2} parent=0
    _
  %s6 = ssub.s32 1, %s4
  %s7 = scalar_select 0, %s6, %s4
  $region1: #{mmoe_forward.2} parent=0
    #allocation2 [shape = 'u8[49152]{0}', space=vmem, size = 0xc000, scoped, tag = 'input window, operand 1, single buffered']
    #allocation3 [shape = 's32[1]{0}', space=sflag, size = 0x4, scoped, tag = 'scoped memory for mmoe_forward.2']
    #allocation4 [shape = 'u8[2048]{0}', space=vmem, size = 0x800, scoped, tag = 'input window, operand 2, single buffered']
    #allocation5 [shape = 's32[1]{0}', space=sflag, size = 0x4, scoped, tag = 'scoped memory for mmoe_forward.2']
    %8 = vsyncpa [#allocation3], 0
    %9 = vsyncpa [#allocation5], 0
    // Predicated region
    $region2: #{mmoe_forward.2} parent=1 // pred_check
      _
    $region3: #{mmoe_forward.2} parent=1 // pred_check_branch
      %11 = sbr.rel (0) target = $region5
    $region4: #{mmoe_forward.2} parent=1 // pred_region
      _
    $region5: #{mmoe_forward.2} parent=1 // pred_fallthru
      _
    // Predicated region
    $region6: #{mmoe_forward.2} parent=1 // pred_check
      _
    $region7: #{mmoe_forward.2} parent=1 // pred_check_branch
      %13 = sbr.rel (0) target = $region9
    $region8: #{mmoe_forward.2} parent=1 // pred_region
      %s15 = ssub.s32 1536, 1536
      %16 = vsyncadd [#allocation3], %s15
      %s17 = sshll.u32 [#allocation2], 4
      %s18 = int_to_ptr.vmem [resolvable:$true] %s17
      %23 = dma.hbm_to_vmem [thread:$0]  %s1, 1536, %s18, [#allocation3], 512, 512, 32
    $region9: #{mmoe_forward.2} parent=1 // pred_fallthru
      _
    // Predicated region
    $region10: #{mmoe_forward.2} parent=1 // pred_check
      _
    $region11: #{mmoe_forward.2} parent=1 // pred_check_branch
      %25 = sbr.rel (0) target = $region13
    $region12: #{mmoe_forward.2} parent=1 // pred_region
      %s27 = ssub.s32 64, 64
      %28 = vsyncadd [#allocation5], %s27
      %s30 = sshll.u32 [#allocation4], 4
      %s31 = int_to_ptr.vmem [resolvable:$true] %s30
      %33 = dma.hbm_to_vmem [thread:$0]  %s2, 64, %s31, [#allocation5]
    $region13: #{mmoe_forward.2} parent=1 // pred_fallthru
      _
    // Predicated region
    $region14: #{mmoe_forward.2} parent=1 // pred_check
      _
    $region15: #{mmoe_forward.2} parent=1 // pred_check_branch
      %35 = sbr.rel (0) target = $region17
    $region16: #{mmoe_forward.2} parent=1 // pred_region
      %36 = dma.done [#allocation3], 1536
    $region17: #{mmoe_forward.2} parent=1 // pred_fallthru
      _
    // Predicated region
    $region18: #{mmoe_forward.2} parent=1 // pred_check
      _
    $region19: #{mmoe_forward.2} parent=1 // pred_check_branch
      %38 = sbr.rel (0) target = $region21
    $region20: #{mmoe_forward.2} parent=1 // pred_region
      %39 = dma.done [#allocation5], 64
    $region21: #{mmoe_forward.2} parent=1 // pred_fallthru
      _
    %p40 = scmp.eq.s32.totalorder 0, 0
    // Predicated region
    $region22: #{mmoe_forward.2} parent=1 // pred_check
      %p41 = pneg %p40
    $region23: #{mmoe_forward.2} parent=1 // pred_check_branch
      %43 = sbr.rel (%p41) target = $region25
    $region24: #{mmoe_forward.2} parent=1 // pred_region
      %44 = vst [vmem:[%s3] sm:$0xff] 0.0
    $region25: #{mmoe_forward.2} parent=1 // pred_fallthru
      _
    %v45 = vld [vmem:[%s0] sm:$0xff]
    %v46 = vld [vmem:[#allocation2] sm:$0xff]
    %v47 = vld [vmem:[#allocation2 + $0x8] sm:$0xff]
    %v48 = vld [vmem:[#allocation2 + $0x10] sm:$0xff]
    %v49 = vld [vmem:[#allocation2 + $0x18] sm:$0xff]
    %v50 = vld [vmem:[#allocation2 + $0x20] sm:$0xff]
    %v51 = vld [vmem:[#allocation2 + $0x28] sm:$0xff]
    %v52 = vld [vmem:[#allocation2 + $0x30] sm:$0xff]
    %v53 = vld [vmem:[#allocation2 + $0x38] sm:$0xff]
    %v54 = vld [vmem:[#allocation2 + $0x40] sm:$0xf]
    %v55 = vld [vmem:[#allocation2 + $0x48] sm:$0xf]
    %v56 = vld [vmem:[#allocation2 + $0x50] sm:$0xf]
    %v57 = vld [vmem:[#allocation2 + $0x58] sm:$0xf]
    %v58 = vld [vmem:[#allocation4] sm:$0xf]
    %v60 = vlaneseq
    %v61 = vshrl.u32 %v60, 7
    %v62 = vsub.s32 0, %v61
    %v63 = vrot.slane %v58, %v62
    %v64 = vlaneseq
    %v65 = vshrl.u32 %v64, 7
    %v66 = vsub.s32 1, %v65
    %v67 = vrot.slane %v58, %v66
    %v68 = vlaneseq
    %v69 = vshrl.u32 %v68, 7
    %v70 = vsub.s32 2, %v69
    %v71 = vrot.slane %v58, %v70
    %v72 = vlaneseq
    %v73 = vshrl.u32 %v72, 7
    %v74 = vsub.s32 3, %v73
    %v75 = vrot.slane %v58, %v74
    %vm80 = vcmask 162816
    %v82 = vsel %vm80, %v45, 0
    %vm84 = vcmask 1043456
    %v86 = vsel %vm84, %v54, 0
    %v89 = vsel %vm84, %v55, 0
    %v92 = vsel %vm84, %v56, 0
    %v95 = vsel %vm84, %v57, 0
    %97 = vmatprep.subr.mxu0 %v47
    %98 = vmatpush1.msra.mxu0 %v46
    %99 = vmatprep.subr.mxu0 %v51
    %100 = vmatpush1.msra.mxu0 %v50
    %101 = vmatprep.subr.mxu0 %v89
    %102 = vmatpush1.msra.mxu0 %v86
    %103 = vmatprep.subr.mxu0 0.0
    %104 = vmatpush1.msra.mxu0 0.0
    %105 = vmatprep.subr.mxu0 0.0
    %106 = vmatpush1.msra.mxu0 0.0
    %107 = vmatprep.subr.mxu0 0.0
    %108 = vmatpush1.msra.mxu0 0.0
    %109 = vmatprep.subr.mxu0 0.0
    %110 = vmatpush1.msra.mxu0 0.0
    %111 = vmatprep.subr.mxu0 0.0
    %112 = vmatpush1.msra.mxu0 0.0
    %113 = vmatprep.subr.mxu0 0.0
    %114 = vmatpush1.msra.mxu0 0.0
    %115 = vmatprep.subr.mxu0 0.0
    %116 = vmatpush1.msra.mxu0 0.0
    %117 = vmatprep.subr.mxu0 0.0
    %118 = vmatpush1.msra.mxu0 0.0
    %119 = vmatprep.subr.mxu0 0.0
    %120 = vmatpush1.msra.mxu0 0.0
    %121 = vmatprep.subr.mxu0 0.0
    %122 = vmatpush1.msra.mxu0 0.0
    %123 = vmatprep.subr.mxu0 0.0
    %124 = vmatpush1.msra.mxu0 0.0
    %125 = vmatprep.subr.mxu0 0.0
    %126 = vmatpush1.msra.mxu0 0.0
    %127 = vmatprep.subr.mxu0 0.0
    %128 = vmatpush1.msra.mxu0 0.0
    %129 = vmatprep.subr.mxu0 0.0
    %130 = vmatpush1.msra.mxu0 0.0
    %131 = vmatprep.subr.mxu0 0.0
    %132 = vmatpush1.msra.mxu0 0.0
    %133 = vmatprep.subr.mxu0 0.0
    %134 = vmatpush1.msra.mxu0 0.0
    %135 = vmatprep.subr.mxu0 0.0
    %136 = vmatpush1.msra.mxu0 0.0
    %137 = vmatprep.subr.mxu0 0.0
    %138 = vmatpush1.msra.mxu0 0.0
    %139 = vmatprep.subr.mxu0 0.0
    %140 = vmatpush1.msra.mxu0 0.0
    %141 = vmatprep.subr.mxu0 0.0
    %142 = vmatpush1.msra.mxu0 0.0
    %143 = vmatprep.subr.mxu0 0.0
    %144 = vmatpush1.msra.mxu0 0.0
    %145 = vmatprep.subr.mxu0 0.0
    %146 = vmatpush1.msra.mxu0 0.0
    %147 = vmatprep.subr.mxu0 0.0
    %148 = vmatpush1.msra.mxu0 0.0
    %149 = vmatprep.subr.mxu0 0.0
    %150 = vmatpush1.msra.mxu0 0.0
    %151 = vmatprep.subr.mxu0 0.0
    %152 = vmatpush1.msra.mxu0 0.0
    %153 = vmatprep.subr.mxu0 0.0
    %154 = vmatpush1.msra.mxu0 0.0
    %155 = vmatprep.subr.mxu0 0.0
    %156 = vmatpush1.msra.mxu0 0.0
    %157 = vmatprep.subr.mxu0 0.0
    %158 = vmatpush1.msra.mxu0 0.0
    %159 = vmatprep.subr.mxu0 0.0
    %160 = vmatpush1.msra.mxu0 0.0
    %161 = vmatprep.mubr.f32.mxu0 0.0
    %162 = vmatmul.mubr.f32.gmra.mrb[0].mxu0 %v82
    %v163 = vpop.f32.mrb[0].mxu0
    %v164 = vadd.f32 %v63, %v163
    %v165 = vpop.f32.mrb[0].mxu0
    %v166 = vadd.f32 %v67, %v165
    %167 = vdwg.mxu0
    %168 = vmatprep.subr.mxu0 %v49
    %169 = vmatpush1.msra.mxu0 %v48
    %170 = vmatprep.subr.mxu0 %v53
    %171 = vmatpush1.msra.mxu0 %v52
    %172 = vmatprep.subr.mxu0 %v95
    %173 = vmatpush1.msra.mxu0 %v92
    %174 = vmatprep.subr.mxu0 0.0
    %175 = vmatpush1.msra.mxu0 0.0
    %176 = vmatprep.subr.mxu0 0.0
    %177 = vmatpush1.msra.mxu0 0.0
    %178 = vmatprep.subr.mxu0 0.0
    %179 = vmatpush1.msra.mxu0 0.0
    %180 = vmatprep.subr.mxu0 0.0
    %181 = vmatpush1.msra.mxu0 0.0
    %182 = vmatprep.subr.mxu0 0.0
    %183 = vmatpush1.msra.mxu0 0.0
    %184 = vmatprep.subr.mxu0 0.0
    %185 = vmatpush1.msra.mxu0 0.0
    %186 = vmatprep.subr.mxu0 0.0
    %187 = vmatpush1.msra.mxu0 0.0
    %188 = vmatprep.subr.mxu0 0.0
    %189 = vmatpush1.msra.mxu0 0.0
    %190 = vmatprep.subr.mxu0 0.0
    %191 = vmatpush1.msra.mxu0 0.0
    %192 = vmatprep.subr.mxu0 0.0
    %193 = vmatpush1.msra.mxu0 0.0
    %194 = vmatprep.subr.mxu0 0.0
    %195 = vmatpush1.msra.mxu0 0.0
    %196 = vmatprep.subr.mxu0 0.0
    %197 = vmatpush1.msra.mxu0 0.0
    %198 = vmatprep.subr.mxu0 0.0
    %199 = vmatpush1.msra.mxu0 0.0
    %200 = vmatprep.subr.mxu0 0.0
    %201 = vmatpush1.msra.mxu0 0.0
    %202 = vmatprep.subr.mxu0 0.0
    %203 = vmatpush1.msra.mxu0 0.0
    %204 = vmatprep.subr.mxu0 0.0
    %205 = vmatpush1.msra.mxu0 0.0
    %206 = vmatprep.subr.mxu0 0.0
    %207 = vmatpush1.msra.mxu0 0.0
    %208 = vmatprep.subr.mxu0 0.0
    %209 = vmatpush1.msra.mxu0 0.0
    %210 = vmatprep.subr.mxu0 0.0
    %211 = vmatpush1.msra.mxu0 0.0
    %212 = vmatprep.subr.mxu0 0.0
    %213 = vmatpush1.msra.mxu0 0.0
    %214 = vmatprep.subr.mxu0 0.0
    %215 = vmatpush1.msra.mxu0 0.0
    %216 = vmatprep.subr.mxu0 0.0
    %217 = vmatpush1.msra.mxu0 0.0
    %218 = vmatprep.subr.mxu0 0.0
    %219 = vmatpush1.msra.mxu0 0.0
    %220 = vmatprep.subr.mxu0 0.0
    %221 = vmatpush1.msra.mxu0 0.0
    %222 = vmatprep.subr.mxu0 0.0
    %223 = vmatpush1.msra.mxu0 0.0
    %224 = vmatprep.subr.mxu0 0.0
    %225 = vmatpush1.msra.mxu0 0.0
    %226 = vmatprep.subr.mxu0 0.0
    %227 = vmatpush1.msra.mxu0 0.0
    %228 = vmatprep.subr.mxu0 0.0
    %229 = vmatpush1.msra.mxu0 0.0
    %230 = vmatprep.subr.mxu0 0.0
    %231 = vmatpush1.msra.mxu0 0.0
    %232 = vmatprep.mubr.f32.mxu0 0.0
    %233 = vmatmul.mubr.f32.gmra.mrb[0].mxu0 %v82
    %v234 = vpop.f32.mrb[0].mxu0
    %v235 = vadd.f32 %v71, %v234
    %v236 = vpop.f32.mrb[0].mxu0
    %v237 = vadd.f32 %v75, %v236
    %238 = vdwg.mxu0
    %v239 = vmul.f32 %v164, 0.5
    %v240 = vmul.f32 %v166, 0.5
    %v241 = vmul.f32 %v235, 0.5
    %v242 = vmul.f32 %v237, 0.5
    %v243 = vmul.f32 %v164, 0.70710677
    %v244 = vmul.f32 %v166, 0.70710677
    %v245 = vmul.f32 %v235, 0.70710677
    %v246 = vmul.f32 %v237, 0.70710677
    %v247 = verf.f32.pop %v243
    %v248 = verf.f32.pop %v244
    %v249 = verf.f32.pop %v245
    %v250 = verf.f32.pop %v246
    %v251 = vadd.f32 %v247, 1.0
    %v252 = vadd.f32 %v248, 1.0
    %v253 = vadd.f32 %v249, 1.0
    %v254 = vadd.f32 %v250, 1.0
    %v255 = vmul.f32 %v239, %v251
    %v256 = vmul.f32 %v240, %v252
    %v257 = vmul.f32 %v241, %v253
    %v258 = vmul.f32 %v242, %v254
    %v259 = vrot.slane %v255, 4
    %v260 = vadd.f32 %v255, %v259
    %v261 = vrot.slane %v260, 2
    %v262 = vadd.f32 %v260, %v261
    %v263 = vrot.slane %v262, 1
    %v264 = vadd.f32 %v262, %v263
    %v265 = vrot.slane %v256, 4
    %v266 = vadd.f32 %v256, %v265
    %v267 = vrot.slane %v266, 2
    %v268 = vadd.f32 %v266, %v267
    %v269 = vrot.slane %v268, 1
    %v270 = vadd.f32 %v268, %v269
    %v271 = vrot.slane %v257, 4
    %v272 = vadd.f32 %v257, %v271
    %v273 = vrot.slane %v272, 2
    %v274 = vadd.f32 %v272, %v273
    %v275 = vrot.slane %v274, 1
    %v276 = vadd.f32 %v274, %v275
    %v277 = vrot.slane %v258, 4
    %v278 = vadd.f32 %v258, %v277
    %v279 = vrot.slane %v278, 2
    %v280 = vadd.f32 %v278, %v279
    %v281 = vrot.slane %v280, 1
    %v282 = vadd.f32 %v280, %v281
    %v283 = vmul.f32 %v255, %v255
    %v284 = vmul.f32 %v256, %v256
    %v285 = vmul.f32 %v257, %v257
    %v286 = vmul.f32 %v258, %v258
    %v287 = vrot.slane %v283, 4
    %v288 = vadd.f32 %v283, %v287
    %v289 = vrot.slane %v288, 2
    %v290 = vadd.f32 %v288, %v289
    %v291 = vrot.slane %v290, 1
    %v292 = vadd.f32 %v290, %v291
    %v293 = vrot.slane %v284, 4
    %v294 = vadd.f32 %v284, %v293
    %v295 = vrot.slane %v294, 2
    %v296 = vadd.f32 %v294, %v295
    %v297 = vrot.slane %v296, 1
    %v298 = vadd.f32 %v296, %v297
    %v299 = vrot.slane %v285, 4
    %v300 = vadd.f32 %v285, %v299
    %v301 = vrot.slane %v300, 2
    %v302 = vadd.f32 %v300, %v301
    %v303 = vrot.slane %v302, 1
    %v304 = vadd.f32 %v302, %v303
    %v305 = vrot.slane %v286, 4
    %v306 = vadd.f32 %v286, %v305
    %v307 = vrot.slane %v306, 2
    %v308 = vadd.f32 %v306, %v307
    %v309 = vrot.slane %v308, 1
    %v310 = vadd.f32 %v308, %v309
    %v311 = vld [vmem:[%s3] sm:$0xff]
    %vm312 = vcmask 1040384
    %v313 = vsel %vm312, %v264, %v292
    %v314 = vsel %vm312, %v270, %v298
    %v315 = vsel %vm312, %v276, %v304
    %v316 = vsel %vm312, %v282, %v310
    %v321 = vcombine.low %v313, %v314
    %v322 = vcombine.low %v315, %v316
    %v324 = vunpack.c.l.s4 1983009808
    %v325 = vunpack.c.0.s8 %v324
    %v326 = vlaneseq
    %v327 = vshrl.u32 %v326, 7
    %v328 = vsub.s32 %v325, %v327
    %v329 = vrot.slane %v321, %v328
    %v331 = vunpack.c.l.s4 1983009808
    %v332 = vunpack.c.0.s8 %v331
    %v333 = vlaneseq
    %v334 = vshrl.u32 %v333, 7
    %v335 = vsub.s32 %v332, %v334
    %v336 = vrot.slane %v322, %v335
    %v337 = vcombine.low %v329, %v336
    %v339 = vadd.f32 %v311, %v337
    %340 = vst [vmem:[%s3] sm:$0xff] %v339
    // Predicated region
    $region26: #{mmoe_forward.2} parent=1 // pred_check
      _
    $region27: #{mmoe_forward.2} parent=1 // pred_check_branch
      %342 = sbr.rel (0) target = $region29
    $region28: #{mmoe_forward.2} parent=1 // pred_region
      _
    $region29: #{mmoe_forward.2} parent=1 // pred_fallthru
      _
    // Predicated region
    $region30: #{mmoe_forward.2} parent=1 // pred_check
      _
    $region31: #{mmoe_forward.2} parent=1 // pred_check_branch
      %344 = sbr.rel (0) target = $region33
    $region32: #{mmoe_forward.2} parent=1 // pred_region
      _
    $region33: #{mmoe_forward.2} parent=1 // pred_fallthru
      _
    %345 = vsyncpa [#allocation3], 1
    %346 = vsyncpa [#allocation5], 1

// kernel: mmoe_forward.3
$region0: #{mmoe_forward.3}
  #allocation0 [shape = 'u32[]', space=smem, size = 0x4, offset = 0x4, fixed_abs, tag = 'smem constant byte address 0x4 - core index']
  #allocation1 [shape = 'u32[144,128]{1,0:T(1,128)}', space=vmem, size = 0x12000, scoped, tag = 'internal scratch']
  %s0 = inlined_call_operand.vmem [shape: f32[8,20], index: 0, kind: input, shape index: {}]
  %s1 = inlined_call_operand.vmem [shape: f32[20,776], index: 1, kind: input, shape index: {}]
  %s2 = inlined_call_operand.vmem [shape: f32[1,776], index: 2, kind: input, shape index: {}]
  %s3 = inlined_call_operand.vmem [shape: f32[1,512], index: 3, kind: input, shape index: {}]
  %s4 = inlined_call_operand.vmem [shape: f32[1,512], index: 4, kind: input, shape index: {}]
  %s5 = inlined_call_operand.hbm [shape: f32[512,256], index: 5, kind: input, shape index: {}]
  %s6 = inlined_call_operand.vmem [shape: f32[1,256], index: 6, kind: input, shape index: {}]
  %s7 = inlined_call_operand.vmem [shape: f32[8,8], index: 7, kind: input, shape index: {}]
  %s8 = inlined_call_operand.vmem [shape: f32[1,8], index: 8, kind: input, shape index: {}]
  %s9 = inlined_call_operand.vmem [shape: f32[8,512], index: 9, kind: input, shape index: {}]
  %s10 = inlined_call_operand.vmem [shape: f32[512,8], index: 10, kind: input, shape index: {}]
  %s11 = inlined_call_operand.vmem [shape: f32[1,8], index: 11, kind: input, shape index: {}]
  %s12 = inlined_call_operand.vmem [shape: f32[8,8], index: 12, kind: output, shape index: {}]
  %s13 = sld [smem:[#allocation0]]
  $region62: #{mmoe_forward.3} parent=0
    _
  %s15 = ssub.s32 1, %s13
  %s16 = scalar_select 0, %s15, %s13
  $region1: #{mmoe_forward.3} parent=0
    #allocation2 [shape = 'u8[524288]{0}', space=vmem, size = 0x80000, scoped, tag = 'input window, operand 5, single buffered']
    #allocation3 [shape = 's32[1]{0}', space=sflag, size = 0x4, scoped, tag = 'scoped memory for mmoe_forward.3']
    %17 = vsyncpa [#allocation3], 0
    // Predicated region
    $region2: #{mmoe_forward.3} parent=1 // pred_check
      _
    $region3: #{mmoe_forward.3} parent=1 // pred_check_branch
      %19 = sbr.rel (0) target = $region5
    $region4: #{mmoe_forward.3} parent=1 // pred_region
      _
    $region5: #{mmoe_forward.3} parent=1 // pred_fallthru
      _
    // Predicated region
    $region6: #{mmoe_forward.3} parent=1 // pred_check
      _
    $region7: #{mmoe_forward.3} parent=1 // pred_check_branch
      %21 = sbr.rel (0) target = $region9
    $region8: #{mmoe_forward.3} parent=1 // pred_region
      _
    $region9: #{mmoe_forward.3} parent=1 // pred_fallthru
      _
    // Predicated region
    $region10: #{mmoe_forward.3} parent=1 // pred_check
      _
    $region11: #{mmoe_forward.3} parent=1 // pred_check_branch
      %23 = sbr.rel (0) target = $region13
    $region12: #{mmoe_forward.3} parent=1 // pred_region
      _
    $region13: #{mmoe_forward.3} parent=1 // pred_fallthru
      _
    // Predicated region
    $region14: #{mmoe_forward.3} parent=1 // pred_check
      _
    $region15: #{mmoe_forward.3} parent=1 // pred_check_branch
      %25 = sbr.rel (0) target = $region17
    $region16: #{mmoe_forward.3} parent=1 // pred_region
      _
    $region17: #{mmoe_forward.3} parent=1 // pred_fallthru
      _
    // Predicated region
    $region18: #{mmoe_forward.3} parent=1 // pred_check
      _
    $region19: #{mmoe_forward.3} parent=1 // pred_check_branch
      %27 = sbr.rel (0) target = $region21
    $region20: #{mmoe_forward.3} parent=1 // pred_region
      _
    $region21: #{mmoe_forward.3} parent=1 // pred_fallthru
      _
    // Predicated region
    $region22: #{mmoe_forward.3} parent=1 // pred_check
      _
    $region23: #{mmoe_forward.3} parent=1 // pred_check_branch
      %29 = sbr.rel (0) target = $region25
    $region24: #{mmoe_forward.3} parent=1 // pred_region
      %s31 = ssub.s32 16384, 16384
      %32 = vsyncadd [#allocation3], %s31
      %s33 = sshll.u32 [#allocation2], 4
      %s34 = int_to_ptr.vmem [resolvable:$true] %s33
      %39 = dma.hbm_to_vmem [thread:$0]  %s5, 16384, %s34, [#allocation3], 256, 256, 16
    $region25: #{mmoe_forward.3} parent=1 // pred_fallthru
      _
    // Predicated region
    $region26: #{mmoe_forward.3} parent=1 // pred_check
      _
    $region27: #{mmoe_forward.3} parent=1 // pred_check_branch
      %41 = sbr.rel (0) target = $region29
    $region28: #{mmoe_forward.3} parent=1 // pred_region
      _
    $region29: #{mmoe_forward.3} parent=1 // pred_fallthru
      _
    // Predicated region
    $region30: #{mmoe_forward.3} parent=1 // pred_check
      _
    $region31: #{mmoe_forward.3} parent=1 // pred_check_branch
      %43 = sbr.rel (0) target = $region33
    $region32: #{mmoe_forward.3} parent=1 // pred_region
      _
    $region33: #{mmoe_forward.3} parent=1 // pred_fallthru
      _
    // Predicated region
    $region34: #{mmoe_forward.3} parent=1 // pred_check
      _
    $region35: #{mmoe_forward.3} parent=1 // pred_check_branch
      %45 = sbr.rel (0) target = $region37
    $region36: #{mmoe_forward.3} parent=1 // pred_region
      _
    $region37: #{mmoe_forward.3} parent=1 // pred_fallthru
      _
    // Predicated region
    $region38: #{mmoe_forward.3} parent=1 // pred_check
      _
    $region39: #{mmoe_forward.3} parent=1 // pred_check_branch
      %47 = sbr.rel (0) target = $region41
    $region40: #{mmoe_forward.3} parent=1 // pred_region
      _
    $region41: #{mmoe_forward.3} parent=1 // pred_fallthru
      _
    // Predicated region
    $region42: #{mmoe_forward.3} parent=1 // pred_check
      _
    $region43: #{mmoe_forward.3} parent=1 // pred_check_branch
      %49 = sbr.rel (0) target = $region45
    $region44: #{mmoe_forward.3} parent=1 // pred_region
      _
    $region45: #{mmoe_forward.3} parent=1 // pred_fallthru
      _
    // Predicated region
    $region46: #{mmoe_forward.3} parent=1 // pred_check
      _
    $region47: #{mmoe_forward.3} parent=1 // pred_check_branch
      %51 = sbr.rel (0) target = $region49
    $region48: #{mmoe_forward.3} parent=1 // pred_region
      _
    $region49: #{mmoe_forward.3} parent=1 // pred_fallthru
      _
    // Predicated region
    $region50: #{mmoe_forward.3} parent=1 // pred_check
      _
    $region51: #{mmoe_forward.3} parent=1 // pred_check_branch
      %53 = sbr.rel (0) target = $region53
    $region52: #{mmoe_forward.3} parent=1 // pred_region
      %54 = dma.done [#allocation3], 16384
    $region53: #{mmoe_forward.3} parent=1 // pred_fallthru
      _
    %v55 = vld [vmem:[%s0] sm:$0xff]
    %v56 = vld [vmem:[%s1] sm:$0xff]
    %v57 = vld [vmem:[%s1 + $0x8] sm:$0xff]
    %v58 = vld [vmem:[%s1 + $0x10] sm:$0xff]
    %v59 = vld [vmem:[%s1 + $0x18] sm:$0xff]
    %v60 = vld [vmem:[%s1 + $0x20] sm:$0xff]
    %v61 = vld [vmem:[%s1 + $0x28] sm:$0xff]
    %v62 = vld [vmem:[%s1 + $0x30] sm:$0xff]
    %v63 = vld [vmem:[%s1 + $0x38] sm:$0xff]
    %v64 = vld [vmem:[%s1 + $0x40] sm:$0xff]
    %v65 = vld [vmem:[%s1 + $0x48] sm:$0xff]
    %v66 = vld [vmem:[%s1 + $0x50] sm:$0xff]
    %v67 = vld [vmem:[%s1 + $0x58] sm:$0xff]
    %v68 = vld [vmem:[%s1 + $0x60] sm:$0xff]
    %v69 = vld [vmem:[%s1 + $0x68] sm:$0xff]
    %v70 = vld [vmem:[%s1 + $0x70] sm:$0xf]
    %v71 = vld [vmem:[%s1 + $0x78] sm:$0xf]
    %v72 = vld [vmem:[%s1 + $0x80] sm:$0xf]
    %v73 = vld [vmem:[%s1 + $0x88] sm:$0xf]
    %v74 = vld [vmem:[%s1 + $0x90] sm:$0xf]
    %v75 = vld [vmem:[%s1 + $0x98] sm:$0xf]
    %v76 = vld [vmem:[%s1 + $0xa0] sm:$0xf]
    %v77 = vld [vmem:[%s2] sm:$0x7f]
    %v79 = vlaneseq
    %v80 = vshrl.u32 %v79, 7
    %v81 = vsub.s32 0, %v80
    %v82 = vrot.slane %v77, %v81
    %v83 = vlaneseq
    %v84 = vshrl.u32 %v83, 7
    %v85 = vsub.s32 1, %v84
    %v86 = vrot.slane %v77, %v85
    %v87 = vlaneseq
    %v88 = vshrl.u32 %v87, 7
    %v89 = vsub.s32 2, %v88
    %v90 = vrot.slane %v77, %v89
    %v91 = vlaneseq
    %v92 = vshrl.u32 %v91, 7
    %v93 = vsub.s32 3, %v92
    %v94 = vrot.slane %v77, %v93
    %v95 = vlaneseq
    %v96 = vshrl.u32 %v95, 7
    %v97 = vsub.s32 4, %v96
    %v98 = vrot.slane %v77, %v97
    %v99 = vlaneseq
    %v100 = vshrl.u32 %v99, 7
    %v101 = vsub.s32 5, %v100
    %v102 = vrot.slane %v77, %v101
    %v103 = vlaneseq
    %v104 = vshrl.u32 %v103, 7
    %v105 = vsub.s32 6, %v104
    %v106 = vrot.slane %v77, %v105
    %vm114 = vcmask 162816
    %v116 = vsel %vm114, %v55, 0
    %vm118 = vcmask 1043456
    %v120 = vsel %vm118, %v70, 0
    %v123 = vsel %vm118, %v71, 0
    %v126 = vsel %vm118, %v72, 0
    %v129 = vsel %vm118, %v73, 0
    %v132 = vsel %vm118, %v74, 0
    %v135 = vsel %vm118, %v75, 0
    %v138 = vsel %vm118, %v76, 0
    %140 = vmatprep.subr.mxu0 %v57
    %141 = vmatpush1.msra.mxu0 %v56
    %142 = vmatprep.subr.mxu0 %v64
    %143 = vmatpush1.msra.mxu0 %v63
    %144 = vmatprep.subr.mxu0 %v123
    %145 = vmatpush1.msra.mxu0 %v120
    %146 = vmatprep.subr.mxu0 0.0
    %147 = vmatpush1.msra.mxu0 0.0
    %148 = vmatprep.subr.mxu0 0.0
    %149 = vmatpush1.msra.mxu0 0.0
    %150 = vmatprep.subr.mxu0 0.0
    %151 = vmatpush1.msra.mxu0 0.0
    %152 = vmatprep.subr.mxu0 0.0
    %153 = vmatpush1.msra.mxu0 0.0
    %154 = vmatprep.subr.mxu0 0.0
    %155 = vmatpush1.msra.mxu0 0.0
    %156 = vmatprep.subr.mxu0 0.0
    %157 = vmatpush1.msra.mxu0 0.0
    %158 = vmatprep.subr.mxu0 0.0
    %159 = vmatpush1.msra.mxu0 0.0
    %160 = vmatprep.subr.mxu0 0.0
    %161 = vmatpush1.msra.mxu0 0.0
    %162 = vmatprep.subr.mxu0 0.0
    %163 = vmatpush1.msra.mxu0 0.0
    %164 = vmatprep.subr.mxu0 0.0
    %165 = vmatpush1.msra.mxu0 0.0
    %166 = vmatprep.subr.mxu0 0.0
    %167 = vmatpush1.msra.mxu0 0.0
    %168 = vmatprep.subr.mxu0 0.0
    %169 = vmatpush1.msra.mxu0 0.0
    %170 = vmatprep.subr.mxu0 0.0
    %171 = vmatpush1.msra.mxu0 0.0
    %172 = vmatprep.subr.mxu0 0.0
    %173 = vmatpush1.msra.mxu0 0.0
    %174 = vmatprep.subr.mxu0 0.0
    %175 = vmatpush1.msra.mxu0 0.0
    %176 = vmatprep.subr.mxu0 0.0
    %177 = vmatpush1.msra.mxu0 0.0
    %178 = vmatprep.subr.mxu0 0.0
    %179 = vmatpush1.msra.mxu0 0.0
    %180 = vmatprep.subr.mxu0 0.0
    %181 = vmatpush1.msra.mxu0 0.0
    %182 = vmatprep.subr.mxu0 0.0
    %183 = vmatpush1.msra.mxu0 0.0
    %184 = vmatprep.subr.mxu0 0.0
    %185 = vmatpush1.msra.mxu0 0.0
    %186 = vmatprep.subr.mxu0 0.0
    %187 = vmatpush1.msra.mxu0 0.0
    %188 = vmatprep.subr.mxu0 0.0
    %189 = vmatpush1.msra.mxu0 0.0
    %190 = vmatprep.subr.mxu0 0.0
    %191 = vmatpush1.msra.mxu0 0.0
    %192 = vmatprep.subr.mxu0 0.0
    %193 = vmatpush1.msra.mxu0 0.0
    %194 = vmatprep.subr.mxu0 0.0
    %195 = vmatpush1.msra.mxu0 0.0
    %196 = vmatprep.subr.mxu0 0.0
    %197 = vmatpush1.msra.mxu0 0.0
    %198 = vmatprep.subr.mxu0 0.0
    %199 = vmatpush1.msra.mxu0 0.0
    %200 = vmatprep.subr.mxu0 0.0
    %201 = vmatpush1.msra.mxu0 0.0
    %202 = vmatprep.subr.mxu0 0.0
    %203 = vmatpush1.msra.mxu0 0.0
    %204 = vmatprep.mubr.f32.mxu0 0.0
    %205 = vmatmul.mubr.f32.gmra.mrb[0].mxu0 %v116
    %v206 = vpop.f32.mrb[0].mxu0
    %v207 = vadd.f32 %v82, %v206
    %v208 = vpop.f32.mrb[0].mxu0
    %v209 = vadd.f32 %v86, %v208
    %210 = vdwg.mxu0
    %211 = vmatprep.subr.mxu0 %v59
    %212 = vmatpush1.msra.mxu0 %v58
    %213 = vmatprep.subr.mxu0 %v66
    %214 = vmatpush1.msra.mxu0 %v65
    %215 = vmatprep.subr.mxu0 %v129
    %216 = vmatpush1.msra.mxu0 %v126
    %217 = vmatprep.subr.mxu0 0.0
    %218 = vmatpush1.msra.mxu0 0.0
    %219 = vmatprep.subr.mxu0 0.0
    %220 = vmatpush1.msra.mxu0 0.0
    %221 = vmatprep.subr.mxu0 0.0
    %222 = vmatpush1.msra.mxu0 0.0
    %223 = vmatprep.subr.mxu0 0.0
    %224 = vmatpush1.msra.mxu0 0.0
    %225 = vmatprep.subr.mxu0 0.0
    %226 = vmatpush1.msra.mxu0 0.0
    %227 = vmatprep.subr.mxu0 0.0
    %228 = vmatpush1.msra.mxu0 0.0
    %229 = vmatprep.subr.mxu0 0.0
    %230 = vmatpush1.msra.mxu0 0.0
    %231 = vmatprep.subr.mxu0 0.0
    %232 = vmatpush1.msra.mxu0 0.0
    %233 = vmatprep.subr.mxu0 0.0
    %234 = vmatpush1.msra.mxu0 0.0
    %235 = vmatprep.subr.mxu0 0.0
    %236 = vmatpush1.msra.mxu0 0.0
    %237 = vmatprep.subr.mxu0 0.0
    %238 = vmatpush1.msra.mxu0 0.0
    %239 = vmatprep.subr.mxu0 0.0
    %240 = vmatpush1.msra.mxu0 0.0
    %241 = vmatprep.subr.mxu0 0.0
    %242 = vmatpush1.msra.mxu0 0.0
    %243 = vmatprep.subr.mxu0 0.0
    %244 = vmatpush1.msra.mxu0 0.0
    %245 = vmatprep.subr.mxu0 0.0
    %246 = vmatpush1.msra.mxu0 0.0
    %247 = vmatprep.subr.mxu0 0.0
    %248 = vmatpush1.msra.mxu0 0.0
    %249 = vmatprep.subr.mxu0 0.0
    %250 = vmatpush1.msra.mxu0 0.0
    %251 = vmatprep.subr.mxu0 0.0
    %252 = vmatpush1.msra.mxu0 0.0
    %253 = vmatprep.subr.mxu0 0.0
    %254 = vmatpush1.msra.mxu0 0.0
    %255 = vmatprep.subr.mxu0 0.0
    %256 = vmatpush1.msra.mxu0 0.0
    %257 = vmatprep.subr.mxu0 0.0
    %258 = vmatpush1.msra.mxu0 0.0
    %259 = vmatprep.subr.mxu0 0.0
    %260 = vmatpush1.msra.mxu0 0.0
    %261 = vmatprep.subr.mxu0 0.0
    %262 = vmatpush1.msra.mxu0 0.0
    %263 = vmatprep.subr.mxu0 0.0
    %264 = vmatpush1.msra.mxu0 0.0
    %265 = vmatprep.subr.mxu0 0.0
    %266 = vmatpush1.msra.mxu0 0.0
    %267 = vmatprep.subr.mxu0 0.0
    %268 = vmatpush1.msra.mxu0 0.0
    %269 = vmatprep.subr.mxu0 0.0
    %270 = vmatpush1.msra.mxu0 0.0
    %271 = vmatprep.subr.mxu0 0.0
    %272 = vmatpush1.msra.mxu0 0.0
    %273 = vmatprep.subr.mxu0 0.0
    %274 = vmatpush1.msra.mxu0 0.0
    %275 = vmatprep.mubr.f32.mxu0 0.0
    %276 = vmatmul.mubr.f32.gmra.mrb[0].mxu0 %v116
    %v277 = vpop.f32.mrb[0].mxu0
    %v278 = vadd.f32 %v90, %v277
    %v279 = vpop.f32.mrb[0].mxu0
    %v280 = vadd.f32 %v94, %v279
    %281 = vdwg.mxu0
    %282 = vmatprep.subr.mxu0 %v61
    %283 = vmatpush1.msra.mxu0 %v60
    %284 = vmatprep.subr.mxu0 %v68
    %285 = vmatpush1.msra.mxu0 %v67
    %286 = vmatprep.subr.mxu0 %v135
    %287 = vmatpush1.msra.mxu0 %v132
    %288 = vmatprep.subr.mxu0 0.0
    %289 = vmatpush1.msra.mxu0 0.0
    %290 = vmatprep.subr.mxu0 0.0
    %291 = vmatpush1.msra.mxu0 0.0
    %292 = vmatprep.subr.mxu0 0.0
    %293 = vmatpush1.msra.mxu0 0.0
    %294 = vmatprep.subr.mxu0 0.0
    %295 = vmatpush1.msra.mxu0 0.0
    %296 = vmatprep.subr.mxu0 0.0
    %297 = vmatpush1.msra.mxu0 0.0
    %298 = vmatprep.subr.mxu0 0.0
    %299 = vmatpush1.msra.mxu0 0.0
    %300 = vmatprep.subr.mxu0 0.0
    %301 = vmatpush1.msra.mxu0 0.0
    %302 = vmatprep.subr.mxu0 0.0
    %303 = vmatpush1.msra.mxu0 0.0
    %304 = vmatprep.subr.mxu0 0.0
    %305 = vmatpush1.msra.mxu0 0.0
    %306 = vmatprep.subr.mxu0 0.0
    %307 = vmatpush1.msra.mxu0 0.0
    %308 = vmatprep.subr.mxu0 0.0
    %309 = vmatpush1.msra.mxu0 0.0
    %310 = vmatprep.subr.mxu0 0.0
    %311 = vmatpush1.msra.mxu0 0.0
    %312 = vmatprep.subr.mxu0 0.0
    %313 = vmatpush1.msra.mxu0 0.0
    %314 = vmatprep.subr.mxu0 0.0
    %315 = vmatpush1.msra.mxu0 0.0
    %316 = vmatprep.subr.mxu0 0.0
    %317 = vmatpush1.msra.mxu0 0.0
    %318 = vmatprep.subr.mxu0 0.0
    %319 = vmatpush1.msra.mxu0 0.0
    %320 = vmatprep.subr.mxu0 0.0
    %321 = vmatpush1.msra.mxu0 0.0
    %322 = vmatprep.subr.mxu0 0.0
    %323 = vmatpush1.msra.mxu0 0.0
    %324 = vmatprep.subr.mxu0 0.0
    %325 = vmatpush1.msra.mxu0 0.0
    %326 = vmatprep.subr.mxu0 0.0
    %327 = vmatpush1.msra.mxu0 0.0
    %328 = vmatprep.subr.mxu0 0.0
    %329 = vmatpush1.msra.mxu0 0.0
    %330 = vmatprep.subr.mxu0 0.0
    %331 = vmatpush1.msra.mxu0 0.0
    %332 = vmatprep.subr.mxu0 0.0
    %333 = vmatpush1.msra.mxu0 0.0
    %334 = vmatprep.subr.mxu0 0.0
    %335 = vmatpush1.msra.mxu0 0.0
    %336 = vmatprep.subr.mxu0 0.0
    %337 = vmatpush1.msra.mxu0 0.0
    %338 = vmatprep.subr.mxu0 0.0
    %339 = vmatpush1.msra.mxu0 0.0
    %340 = vmatprep.subr.mxu0 0.0
    %341 = vmatpush1.msra.mxu0 0.0
    %342 = vmatprep.subr.mxu0 0.0
    %343 = vmatpush1.msra.mxu0 0.0
    %344 = vmatprep.subr.mxu0 0.0
    %345 = vmatpush1.msra.mxu0 0.0
    %346 = vmatprep.mubr.f32.mxu0 0.0
    %347 = vmatmul.mubr.f32.gmra.mrb[0].mxu0 %v116
    %v348 = vpop.f32.mrb[0].mxu0
    %v349 = vadd.f32 %v98, %v348
    %v350 = vpop.f32.mrb[0].mxu0
    %v351 = vadd.f32 %v102, %v350
    %352 = vdwg.mxu0
    %353 = vmatprep.subr.mxu0 0.0
    %354 = vmatpush1.msra.mxu0 %v62
    %355 = vmatprep.subr.mxu0 0.0
    %356 = vmatpush1.msra.mxu0 %v69
    %357 = vmatprep.subr.mxu0 0.0
    %358 = vmatpush1.msra.mxu0 %v138
    %359 = vmatprep.subr.mxu0 0.0
    %360 = vmatpush1.msra.mxu0 0.0
    %361 = vmatprep.subr.mxu0 0.0
    %362 = vmatpush1.msra.mxu0 0.0
    %363 = vmatprep.subr.mxu0 0.0
    %364 = vmatpush1.msra.mxu0 0.0
    %365 = vmatprep.subr.mxu0 0.0
    %366 = vmatpush1.msra.mxu0 0.0
    %367 = vmatprep.subr.mxu0 0.0
    %368 = vmatpush1.msra.mxu0 0.0
    %369 = vmatprep.subr.mxu0 0.0
    %370 = vmatpush1.msra.mxu0 0.0
    %371 = vmatprep.subr.mxu0 0.0
    %372 = vmatpush1.msra.mxu0 0.0
    %373 = vmatprep.subr.mxu0 0.0
    %374 = vmatpush1.msra.mxu0 0.0
    %375 = vmatprep.subr.mxu0 0.0
    %376 = vmatpush1.msra.mxu0 0.0
    %377 = vmatprep.subr.mxu0 0.0
    %378 = vmatpush1.msra.mxu0 0.0
    %379 = vmatprep.subr.mxu0 0.0
    %380 = vmatpush1.msra.mxu0 0.0
    %381 = vmatprep.subr.mxu0 0.0
    %382 = vmatpush1.msra.mxu0 0.0
    %383 = vmatprep.subr.mxu0 0.0
    %384 = vmatpush1.msra.mxu0 0.0
    %385 = vmatprep.subr.mxu0 0.0
    %386 = vmatpush1.msra.mxu0 0.0
    %387 = vmatprep.subr.mxu0 0.0
    %388 = vmatpush1.msra.mxu0 0.0
    %389 = vmatprep.subr.mxu0 0.0
    %390 = vmatpush1.msra.mxu0 0.0
    %391 = vmatprep.subr.mxu0 0.0
    %392 = vmatpush1.msra.mxu0 0.0
    %393 = vmatprep.subr.mxu0 0.0
    %394 = vmatpush1.msra.mxu0 0.0
    %395 = vmatprep.subr.mxu0 0.0
    %396 = vmatpush1.msra.mxu0 0.0
    %397 = vmatprep.subr.mxu0 0.0
    %398 = vmatpush1.msra.mxu0 0.0
    %399 = vmatprep.subr.mxu0 0.0
    %400 = vmatpush1.msra.mxu0 0.0
    %401 = vmatprep.subr.mxu0 0.0
    %402 = vmatpush1.msra.mxu0 0.0
    %403 = vmatprep.subr.mxu0 0.0
    %404 = vmatpush1.msra.mxu0 0.0
    %405 = vmatprep.subr.mxu0 0.0
    %406 = vmatpush1.msra.mxu0 0.0
    %407 = vmatprep.subr.mxu0 0.0
    %408 = vmatpush1.msra.mxu0 0.0
    %409 = vmatprep.subr.mxu0 0.0
    %410 = vmatpush1.msra.mxu0 0.0
    %411 = vmatprep.subr.mxu0 0.0
    %412 = vmatpush1.msra.mxu0 0.0
    %413 = vmatprep.subr.mxu0 0.0
    %414 = vmatpush1.msra.mxu0 0.0
    %415 = vmatprep.subr.mxu0 0.0
    %416 = vmatpush1.msra.mxu0 0.0
    %417 = vmatprep.mubr.f32.mxu0 0.0
    %418 = vmatmul.mubr.f32.gmra.mrb[0].mxu0 %v116
    %v419 = vpop.f32.mrb[0].mxu0
    %v420 = vadd.f32 %v106, %v419
    %v421 = vpop.f32.mrb[0].mxu0
    %422 = vdwg.mxu0
    %v423 = vmul.f32 %v278, 0.5
    %v424 = vmul.f32 %v280, 0.5
    %v425 = vmul.f32 %v349, 0.5
    %v426 = vmul.f32 %v351, 0.5
    %v427 = vmul.f32 %v278, 0.70710677
    %v428 = vmul.f32 %v280, 0.70710677
    %v429 = vmul.f32 %v349, 0.70710677
    %v430 = vmul.f32 %v351, 0.70710677
    %v431 = verf.f32.pop %v427
    %v432 = verf.f32.pop %v428
    %v433 = verf.f32.pop %v429
    %v434 = verf.f32.pop %v430
    %v435 = vadd.f32 %v431, 1.0
    %v436 = vadd.f32 %v432, 1.0
    %v437 = vadd.f32 %v433, 1.0
    %v438 = vadd.f32 %v434, 1.0
    %v439 = vmul.f32 %v423, %v435
    %v440 = vmul.f32 %v424, %v436
    %v441 = vmul.f32 %v425, %v437
    %v442 = vmul.f32 %v426, %v438
    %vm443 = vcmp.gt.f32.partialorder %v420, 0.0
    %v444 = vmul.f32 %v420, 0.01
    %v445 = vsel %vm443, %v420, %v444
    %v446 = vld [vmem:[%s3] sm:$0xf]
    %v448 = vlaneseq
    %v449 = vshrl.u32 %v448, 7
    %v450 = vsub.s32 0, %v449
    %v451 = vrot.slane %v446, %v450
    %v452 = vlaneseq
    %v453 = vshrl.u32 %v452, 7
    %v454 = vsub.s32 1, %v453
    %v455 = vrot.slane %v446, %v454
    %v456 = vlaneseq
    %v457 = vshrl.u32 %v456, 7
    %v458 = vsub.s32 2, %v457
    %v459 = vrot.slane %v446, %v458
    %v460 = vlaneseq
    %v461 = vshrl.u32 %v460, 7
    %v462 = vsub.s32 3, %v461
    %v463 = vrot.slane %v446, %v462
    %v468 = vmul.f32 %v439, %v451
    %v469 = vmul.f32 %v440, %v455
    %v470 = vmul.f32 %v441, %v459
    %v471 = vmul.f32 %v442, %v463
    %v472 = vld [vmem:[%s4] sm:$0xf]
    %v474 = vlaneseq
    %v475 = vshrl.u32 %v474, 7
    %v476 = vsub.s32 0, %v475
    %v477 = vrot.slane %v472, %v476
    %v478 = vlaneseq
    %v479 = vshrl.u32 %v478, 7
    %v480 = vsub.s32 1, %v479
    %v481 = vrot.slane %v472, %v480
    %v482 = vlaneseq
    %v483 = vshrl.u32 %v482, 7
    %v484 = vsub.s32 2, %v483
    %v485 = vrot.slane %v472, %v484
    %v486 = vlaneseq
    %v487 = vshrl.u32 %v486, 7
    %v488 = vsub.s32 3, %v487
    %v489 = vrot.slane %v472, %v488
    %v494 = vadd.f32 %v468, %v477
    %v495 = vadd.f32 %v469, %v481
    %v496 = vadd.f32 %v470, %v485
    %v497 = vadd.f32 %v471, %v489
    %v498 = vld [vmem:[#allocation2] sm:$0xff]
    %v499 = vld [vmem:[#allocation2 + $0x8] sm:$0xff]
    %v500 = vld [vmem:[#allocation2 + $0x10] sm:$0xff]
    %v501 = vld [vmem:[#allocation2 + $0x18] sm:$0xff]
    %v502 = vld [vmem:[#allocation2 + $0x20] sm:$0xff]
    %v503 = vld [vmem:[#allocation2 + $0x28] sm:$0xff]
    %v504 = vld [vmem:[#allocation2 + $0x30] sm:$0xff]
    %v505 = vld [vmem:[#allocation2 + $0x38] sm:$0xff]
    %v506 = vld [vmem:[#allocation2 + $0x40] sm:$0xff]
    %v507 = vld [vmem:[#allocation2 + $0x48] sm:$0xff]
    %v508 = vld [vmem:[#allocation2 + $0x50] sm:$0xff]
    %v509 = vld [vmem:[#allocation2 + $0x58] sm:$0xff]
    %v510 = vld [vmem:[#allocation2 + $0x60] sm:$0xff]
    %v511 = vld [vmem:[#allocation2 + $0x68] sm:$0xff]
    %v512 = vld [vmem:[#allocation2 + $0x70] sm:$0xff]
    %v513 = vld [vmem:[#allocation2 + $0x78] sm:$0xff]
    %v514 = vld [vmem:[#allocation2 + $0x80] sm:$0xff]
    %v515 = vld [vmem:[#allocation2 + $0x88] sm:$0xff]
    %v516 = vld [vmem:[#allocation2 + $0x90] sm:$0xff]
    %v517 = vld [vmem:[#allocation2 + $0x98] sm:$0xff]
    %v518 = vld [vmem:[#allocation2 + $0xa0] sm:$0xff]
    %v519 = vld [vmem:[#allocation2 + $0xa8] sm:$0xff]
    %v520 = vld [vmem:[#allocation2 + $0xb0] sm:$0xff]
    %v521 = vld [vmem:[#allocation2 + $0xb8] sm:$0xff]
    %v522 = vld [vmem:[#allocation2 + $0xc0] sm:$0xff]
    %v523 = vld [vmem:[#allocation2 + $0xc8] sm:$0xff]
    %v524 = vld [vmem:[#allocation2 + $0xd0] sm:$0xff]
    %v525 = vld [vmem:[#allocation2 + $0xd8] sm:$0xff]
    %v526 = vld [vmem:[#allocation2 + $0xe0] sm:$0xff]
    %v527 = vld [vmem:[#allocation2 + $0xe8] sm:$0xff]
    %v528 = vld [vmem:[#allocation2 + $0xf0] sm:$0xff]
    %v529 = vld [vmem:[#allocation2 + $0xf8] sm:$0xff]
    %v530 = vld [vmem:[#allocation2 + $0x100] sm:$0xff]
    %v531 = vld [vmem:[#allocation2 + $0x108] sm:$0xff]
    %v532 = vld [vmem:[#allocation2 + $0x110] sm:$0xff]
    %v533 = vld [vmem:[#allocation2 + $0x118] sm:$0xff]
    %v534 = vld [vmem:[#allocation2 + $0x120] sm:$0xff]
    %v535 = vld [vmem:[#allocation2 + $0x128] sm:$0xff]
    %v536 = vld [vmem:[#allocation2 + $0x130] sm:$0xff]
    %v537 = vld [vmem:[#allocation2 + $0x138] sm:$0xff]
    %v538 = vld [vmem:[#allocation2 + $0x140] sm:$0xff]
    %v539 = vld [vmem:[#allocation2 + $0x148] sm:$0xff]
    %v540 = vld [vmem:[#allocation2 + $0x150] sm:$0xff]
    %v541 = vld [vmem:[#allocation2 + $0x158] sm:$0xff]
    %v542 = vld [vmem:[#allocation2 + $0x160] sm:$0xff]
    %v543 = vld [vmem:[#allocation2 + $0x168] sm:$0xff]
    %v544 = vld [vmem:[#allocation2 + $0x170] sm:$0xff]
    %v545 = vld [vmem:[#allocation2 + $0x178] sm:$0xff]
    %v546 = vld [vmem:[#allocation2 + $0x180] sm:$0xff]
    %v547 = vld [vmem:[#allocation2 + $0x188] sm:$0xff]
    %v548 = vld [vmem:[#allocation2 + $0x190] sm:$0xff]
    %v549 = vld [vmem:[#allocation2 + $0x198] sm:$0xff]
    %v550 = vld [vmem:[#allocation2 + $0x1a0] sm:$0xff]
    %v551 = vld [vmem:[#allocation2 + $0x1a8] sm:$0xff]
    %v552 = vld [vmem:[#allocation2 + $0x1b0] sm:$0xff]
    %v553 = vld [vmem:[#allocation2 + $0x1b8] sm:$0xff]
    %v554 = vld [vmem:[#allocation2 + $0x1c0] sm:$0xff]
    %v555 = vld [vmem:[#allocation2 + $0x1c8] sm:$0xff]
    %v556 = vld [vmem:[#allocation2 + $0x1d0] sm:$0xff]
    %v557 = vld [vmem:[#allocation2 + $0x1d8] sm:$0xff]
    %v558 = vld [vmem:[#allocation2 + $0x1e0] sm:$0xff]
    %v559 = vld [vmem:[#allocation2 + $0x1e8] sm:$0xff]
    %v560 = vld [vmem:[#allocation2 + $0x1f0] sm:$0xff]
    %v561 = vld [vmem:[#allocation2 + $0x1f8] sm:$0xff]
    %v562 = vld [vmem:[#allocation2 + $0x200] sm:$0xff]
    %v563 = vld [vmem:[#allocation2 + $0x208] sm:$0xff]
    %v564 = vld [vmem:[#allocation2 + $0x210] sm:$0xff]
    %v565 = vld [vmem:[#allocation2 + $0x218] sm:$0xff]
    %v566 = vld [vmem:[#allocation2 + $0x220] sm:$0xff]
    %v567 = vld [vmem:[#allocation2 + $0x228] sm:$0xff]
    %v568 = vld [vmem:[#allocation2 + $0x230] sm:$0xff]
    %v569 = vld [vmem:[#allocation2 + $0x238] sm:$0xff]
    %v570 = vld [vmem:[#allocation2 + $0x240] sm:$0xff]
    %v571 = vld [vmem:[#allocation2 + $0x248] sm:$0xff]
    %v572 = vld [vmem:[#allocation2 + $0x250] sm:$0xff]
    %v573 = vld [vmem:[#allocation2 + $0x258] sm:$0xff]
    %v574 = vld [vmem:[#allocation2 + $0x260] sm:$0xff]
    %v575 = vld [vmem:[#allocation2 + $0x268] sm:$0xff]
    %v576 = vld [vmem:[#allocation2 + $0x270] sm:$0xff]
    %v577 = vld [vmem:[#allocation2 + $0x278] sm:$0xff]
    %v578 = vld [vmem:[#allocation2 + $0x280] sm:$0xff]
    %v579 = vld [vmem:[#allocation2 + $0x288] sm:$0xff]
    %v580 = vld [vmem:[#allocation2 + $0x290] sm:$0xff]
    %v581 = vld [vmem:[#allocation2 + $0x298] sm:$0xff]
    %v582 = vld [vmem:[#allocation2 + $0x2a0] sm:$0xff]
    %v583 = vld [vmem:[#allocation2 + $0x2a8] sm:$0xff]
    %v584 = vld [vmem:[#allocation2 + $0x2b0] sm:$0xff]
    %v585 = vld [vmem:[#allocation2 + $0x2b8] sm:$0xff]
    %v586 = vld [vmem:[#allocation2 + $0x2c0] sm:$0xff]
    %v587 = vld [vmem:[#allocation2 + $0x2c8] sm:$0xff]
    %v588 = vld [vmem:[#allocation2 + $0x2d0] sm:$0xff]
    %v589 = vld [vmem:[#allocation2 + $0x2d8] sm:$0xff]
    %v590 = vld [vmem:[#allocation2 + $0x2e0] sm:$0xff]
    %v591 = vld [vmem:[#allocation2 + $0x2e8] sm:$0xff]
    %v592 = vld [vmem:[#allocation2 + $0x2f0] sm:$0xff]
    %v593 = vld [vmem:[#allocation2 + $0x2f8] sm:$0xff]
    %v594 = vld [vmem:[#allocation2 + $0x300] sm:$0xff]
    %v595 = vld [vmem:[#allocation2 + $0x308] sm:$0xff]
    %v596 = vld [vmem:[#allocation2 + $0x310] sm:$0xff]
    %v597 = vld [vmem:[#allocation2 + $0x318] sm:$0xff]
    %v598 = vld [vmem:[#allocation2 + $0x320] sm:$0xff]
    %v599 = vld [vmem:[#allocation2 + $0x328] sm:$0xff]
    %v600 = vld [vmem:[#allocation2 + $0x330] sm:$0xff]
    %v601 = vld [vmem:[#allocation2 + $0x338] sm:$0xff]
    %v602 = vld [vmem:[#allocation2 + $0x340] sm:$0xff]
    %v603 = vld [vmem:[#allocation2 + $0x348] sm:$0xff]
    %v604 = vld [vmem:[#allocation2 + $0x350] sm:$0xff]
    %v605 = vld [vmem:[#allocation2 + $0x358] sm:$0xff]
    %v606 = vld [vmem:[#allocation2 + $0x360] sm:$0xff]
    %v607 = vld [vmem:[#allocation2 + $0x368] sm:$0xff]
    %v608 = vld [vmem:[#allocation2 + $0x370] sm:$0xff]
    %v609 = vld [vmem:[#allocation2 + $0x378] sm:$0xff]
    %v610 = vld [vmem:[#allocation2 + $0x380] sm:$0xff]
    %v611 = vld [vmem:[#allocation2 + $0x388] sm:$0xff]
    %v612 = vld [vmem:[#allocation2 + $0x390] sm:$0xff]
    %v613 = vld [vmem:[#allocation2 + $0x398] sm:$0xff]
    %v614 = vld [vmem:[#allocation2 + $0x3a0] sm:$0xff]
    %v615 = vld [vmem:[#allocation2 + $0x3a8] sm:$0xff]
    %v616 = vld [vmem:[#allocation2 + $0x3b0] sm:$0xff]
    %v617 = vld [vmem:[#allocation2 + $0x3b8] sm:$0xff]
    %v618 = vld [vmem:[#allocation2 + $0x3c0] sm:$0xff]
    %v619 = vld [vmem:[#allocation2 + $0x3c8] sm:$0xff]
    %v620 = vld [vmem:[#allocation2 + $0x3d0] sm:$0xff]
    %v621 = vld [vmem:[#allocation2 + $0x3d8] sm:$0xff]
    %v622 = vld [vmem:[#allocation2 + $0x3e0] sm:$0xff]
    %v623 = vld [vmem:[#allocation2 + $0x3e8] sm:$0xff]
    %v624 = vld [vmem:[#allocation2 + $0x3f0] sm:$0xff]
    %v625 = vld [vmem:[#allocation2 + $0x3f8] sm:$0xff]
    %v626 = vld [vmem:[%s6] sm:$0x3]
    %v628 = vlaneseq
    %v629 = vshrl.u32 %v628, 7
    %v630 = vsub.s32 0, %v629
    %v631 = vrot.slane %v626, %v630
    %v632 = vlaneseq
    %v633 = vshrl.u32 %v632, 7
    %v634 = vsub.s32 1, %v633
    %v635 = vrot.slane %v626, %v634
    %638 = vmatprep.subr.mxu0 %v499
    %639 = vmatpush1.msra.mxu0 %v498
    %640 = vmatprep.subr.mxu0 %v501
    %641 = vmatpush1.msra.mxu0 %v500
    %642 = vmatprep.subr.mxu0 %v503
    %643 = vmatpush1.msra.mxu0 %v502
    %644 = vmatprep.subr.mxu0 %v505
    %645 = vmatpush1.msra.mxu0 %v504
    %646 = vmatprep.subr.mxu0 %v507
    %647 = vmatpush1.msra.mxu0 %v506
    %648 = vmatprep.subr.mxu0 %v509
    %649 = vmatpush1.msra.mxu0 %v508
    %650 = vmatprep.subr.mxu0 %v511
    %651 = vmatpush1.msra.mxu0 %v510
    %652 = vmatprep.subr.mxu0 %v513
    %653 = vmatpush1.msra.mxu0 %v512
    %654 = vmatprep.subr.mxu0 %v515
    %655 = vmatpush1.msra.mxu0 %v514
    %656 = vmatprep.subr.mxu0 %v517
    %657 = vmatpush1.msra.mxu0 %v516
    %658 = vmatprep.subr.mxu0 %v519
    %659 = vmatpush1.msra.mxu0 %v518
    %660 = vmatprep.subr.mxu0 %v521
    %661 = vmatpush1.msra.mxu0 %v520
    %662 = vmatprep.subr.mxu0 %v523
    %663 = vmatpush1.msra.mxu0 %v522
    %664 = vmatprep.subr.mxu0 %v525
    %665 = vmatpush1.msra.mxu0 %v524
    %666 = vmatprep.subr.mxu0 %v527
    %667 = vmatpush1.msra.mxu0 %v526
    %668 = vmatprep.subr.mxu0 %v529
    %669 = vmatpush1.msra.mxu0 %v528
    %670 = vmatprep.subr.mxu0 %v531
    %671 = vmatpush1.msra.mxu0 %v530
    %672 = vmatprep.subr.mxu0 %v533
    %673 = vmatpush1.msra.mxu0 %v532
    %674 = vmatprep.subr.mxu0 %v535
    %675 = vmatpush1.msra.mxu0 %v534
    %676 = vmatprep.subr.mxu0 %v537
    %677 = vmatpush1.msra.mxu0 %v536
    %678 = vmatprep.subr.mxu0 %v539
    %679 = vmatpush1.msra.mxu0 %v538
    %680 = vmatprep.subr.mxu0 %v541
    %681 = vmatpush1.msra.mxu0 %v540
    %682 = vmatprep.subr.mxu0 %v543
    %683 = vmatpush1.msra.mxu0 %v542
    %684 = vmatprep.subr.mxu0 %v545
    %685 = vmatpush1.msra.mxu0 %v544
    %686 = vmatprep.subr.mxu0 %v547
    %687 = vmatpush1.msra.mxu0 %v546
    %688 = vmatprep.subr.mxu0 %v549
    %689 = vmatpush1.msra.mxu0 %v548
    %690 = vmatprep.subr.mxu0 %v551
    %691 = vmatpush1.msra.mxu0 %v550
    %692 = vmatprep.subr.mxu0 %v553
    %693 = vmatpush1.msra.mxu0 %v552
    %694 = vmatprep.subr.mxu0 %v555
    %695 = vmatpush1.msra.mxu0 %v554
    %696 = vmatprep.subr.mxu0 %v557
    %697 = vmatpush1.msra.mxu0 %v556
    %698 = vmatprep.subr.mxu0 %v559
    %699 = vmatpush1.msra.mxu0 %v558
    %700 = vmatprep.subr.mxu0 %v561
    %701 = vmatpush1.msra.mxu0 %v560
    %702 = vmatprep.mubr.f32.mxu0 %v495
    %703 = vmatmul.mubr.f32.gmra.mrb[0].mxu0 %v494
    %v704 = vpop.f32.mrb[0].mxu0
    %v705 = vadd.f32 %v631, %v704
    %v706 = vpop.f32.mrb[0].mxu0
    %v707 = vadd.f32 %v635, %v706
    %708 = vdwg.mxu0
    %709 = vmatprep.subr.mxu0 %v563
    %710 = vmatpush1.msra.mxu0 %v562
    %711 = vmatprep.subr.mxu0 %v565
    %712 = vmatpush1.msra.mxu0 %v564
    %713 = vmatprep.subr.mxu0 %v567
    %714 = vmatpush1.msra.mxu0 %v566
    %715 = vmatprep.subr.mxu0 %v569
    %716 = vmatpush1.msra.mxu0 %v568
    %717 = vmatprep.subr.mxu0 %v571
    %718 = vmatpush1.msra.mxu0 %v570
    %719 = vmatprep.subr.mxu0 %v573
    %720 = vmatpush1.msra.mxu0 %v572
    %721 = vmatprep.subr.mxu0 %v575
    %722 = vmatpush1.msra.mxu0 %v574
    %723 = vmatprep.subr.mxu0 %v577
    %724 = vmatpush1.msra.mxu0 %v576
    %725 = vmatprep.subr.mxu0 %v579
    %726 = vmatpush1.msra.mxu0 %v578
    %727 = vmatprep.subr.mxu0 %v581
    %728 = vmatpush1.msra.mxu0 %v580
    %729 = vmatprep.subr.mxu0 %v583
    %730 = vmatpush1.msra.mxu0 %v582
    %731 = vmatprep.subr.mxu0 %v585
    %732 = vmatpush1.msra.mxu0 %v584
    %733 = vmatprep.subr.mxu0 %v587
    %734 = vmatpush1.msra.mxu0 %v586
    %735 = vmatprep.subr.mxu0 %v589
    %736 = vmatpush1.msra.mxu0 %v588
    %737 = vmatprep.subr.mxu0 %v591
    %738 = vmatpush1.msra.mxu0 %v590
    %739 = vmatprep.subr.mxu0 %v593
    %740 = vmatpush1.msra.mxu0 %v592
    %741 = vmatprep.subr.mxu0 %v595
    %742 = vmatpush1.msra.mxu0 %v594
    %743 = vmatprep.subr.mxu0 %v597
    %744 = vmatpush1.msra.mxu0 %v596
    %745 = vmatprep.subr.mxu0 %v599
    %746 = vmatpush1.msra.mxu0 %v598
    %747 = vmatprep.subr.mxu0 %v601
    %748 = vmatpush1.msra.mxu0 %v600
    %749 = vmatprep.subr.mxu0 %v603
    %750 = vmatpush1.msra.mxu0 %v602
    %751 = vmatprep.subr.mxu0 %v605
    %752 = vmatpush1.msra.mxu0 %v604
    %753 = vmatprep.subr.mxu0 %v607
    %754 = vmatpush1.msra.mxu0 %v606
    %755 = vmatprep.subr.mxu0 %v609
    %756 = vmatpush1.msra.mxu0 %v608
    %757 = vmatprep.subr.mxu0 %v611
    %758 = vmatpush1.msra.mxu0 %v610
    %759 = vmatprep.subr.mxu0 %v613
    %760 = vmatpush1.msra.mxu0 %v612
    %761 = vmatprep.subr.mxu0 %v615
    %762 = vmatpush1.msra.mxu0 %v614
    %763 = vmatprep.subr.mxu0 %v617
    %764 = vmatpush1.msra.mxu0 %v616
    %765 = vmatprep.subr.mxu0 %v619
    %766 = vmatpush1.msra.mxu0 %v618
    %767 = vmatprep.subr.mxu0 %v621
    %768 = vmatpush1.msra.mxu0 %v620
    %769 = vmatprep.subr.mxu0 %v623
    %770 = vmatpush1.msra.mxu0 %v622
    %771 = vmatprep.subr.mxu0 %v625
    %772 = vmatpush1.msra.mxu0 %v624
    %773 = vmatprep.mubr.f32.mxu0 %v497
    %774 = vmatmul.mubr.f32.gmra.mrb[0].mxu0 %v496
    %v775 = vpop.f32.mrb[0].mxu0
    %v776 = vadd.f32 %v705, %v775
    %v777 = vpop.f32.mrb[0].mxu0
    %v778 = vadd.f32 %v707, %v777
    %779 = vdwg.mxu0
    %v780 = vmul.f32 %v776, 0.5
    %v781 = vmul.f32 %v778, 0.5
    %v782 = vmul.f32 %v776, 0.70710677
    %v783 = vmul.f32 %v778, 0.70710677
    %v784 = verf.f32.pop %v782
    %v785 = verf.f32.pop %v783
    %v786 = vadd.f32 %v784, 1.0
    %v787 = vadd.f32 %v785, 1.0
    %v788 = vmul.f32 %v780, %v786
    %v789 = vmul.f32 %v781, %v787
    %v790 = vadd.f32 %v207, %v788
    %v791 = vadd.f32 %v209, %v789
    %v792 = vld [vmem:[%s7] sm:$0xff]
    %v793 = vld [vmem:[%s8] sm:$0x1]
    %v795 = vlaneseq
    %v796 = vshrl.u32 %v795, 7
    %v797 = vsub.s32 0, %v796
    %v798 = vrot.slane %v793, %v797
    %vm800 = vcmask 64512
    %v802 = vsel %vm800, %v445, 0
    %804 = vmatprep.subr.mxu0 0.0
    %805 = vmatpush1.msra.mxu0 %v792
    %806 = vmatprep.subr.mxu0 0.0
    %807 = vmatpush1.msra.mxu0 0.0
    %808 = vmatprep.subr.mxu0 0.0
    %809 = vmatpush1.msra.mxu0 0.0
    %810 = vmatprep.subr.mxu0 0.0
    %811 = vmatpush1.msra.mxu0 0.0
    %812 = vmatprep.subr.mxu0 0.0
    %813 = vmatpush1.msra.mxu0 0.0
    %814 = vmatprep.subr.mxu0 0.0
    %815 = vmatpush1.msra.mxu0 0.0
    %816 = vmatprep.subr.mxu0 0.0
    %817 = vmatpush1.msra.mxu0 0.0
    %818 = vmatprep.subr.mxu0 0.0
    %819 = vmatpush1.msra.mxu0 0.0
    %820 = vmatprep.subr.mxu0 0.0
    %821 = vmatpush1.msra.mxu0 0.0
    %822 = vmatprep.subr.mxu0 0.0
    %823 = vmatpush1.msra.mxu0 0.0
    %824 = vmatprep.subr.mxu0 0.0
    %825 = vmatpush1.msra.mxu0 0.0
    %826 = vmatprep.subr.mxu0 0.0
    %827 = vmatpush1.msra.mxu0 0.0
    %828 = vmatprep.subr.mxu0 0.0
    %829 = vmatpush1.msra.mxu0 0.0
    %830 = vmatprep.subr.mxu0 0.0
    %831 = vmatpush1.msra.mxu0 0.0
    %832 = vmatprep.subr.mxu0 0.0
    %833 = vmatpush1.msra.mxu0 0.0
    %834 = vmatprep.subr.mxu0 0.0
    %835 = vmatpush1.msra.mxu0 0.0
    %836 = vmatprep.subr.mxu0 0.0
    %837 = vmatpush1.msra.mxu0 0.0
    %838 = vmatprep.subr.mxu0 0.0
    %839 = vmatpush1.msra.mxu0 0.0
    %840 = vmatprep.subr.mxu0 0.0
    %841 = vmatpush1.msra.mxu0 0.0
    %842 = vmatprep.subr.mxu0 0.0
    %843 = vmatpush1.msra.mxu0 0.0
    %844 = vmatprep.subr.mxu0 0.0
    %845 = vmatpush1.msra.mxu0 0.0
    %846 = vmatprep.subr.mxu0 0.0
    %847 = vmatpush1.msra.mxu0 0.0
    %848 = vmatprep.subr.mxu0 0.0
    %849 = vmatpush1.msra.mxu0 0.0
    %850 = vmatprep.subr.mxu0 0.0
    %851 = vmatpush1.msra.mxu0 0.0
    %852 = vmatprep.subr.mxu0 0.0
    %853 = vmatpush1.msra.mxu0 0.0
    %854 = vmatprep.subr.mxu0 0.0
    %855 = vmatpush1.msra.mxu0 0.0
    %856 = vmatprep.subr.mxu0 0.0
    %857 = vmatpush1.msra.mxu0 0.0
    %858 = vmatprep.subr.mxu0 0.0
    %859 = vmatpush1.msra.mxu0 0.0
    %860 = vmatprep.subr.mxu0 0.0
    %861 = vmatpush1.msra.mxu0 0.0
    %862 = vmatprep.subr.mxu0 0.0
    %863 = vmatpush1.msra.mxu0 0.0
    %864 = vmatprep.subr.mxu0 0.0
    %865 = vmatpush1.msra.mxu0 0.0
    %866 = vmatprep.subr.mxu0 0.0
    %867 = vmatpush1.msra.mxu0 0.0
    %868 = vmatprep.mubr.f32.mxu0 0.0
    %869 = vmatmul.mubr.f32.gmra.mrb[0].mxu0 %v802
    %v870 = vpop.f32.mrb[0].mxu0
    %v871 = vadd.f32 %v798, %v870
    %v872 = vpop.f32.mrb[0].mxu0
    %873 = vdwg.mxu0
    %vm874 = vcmp.gt.f32.partialorder %v871, 0.0
    %v875 = vmul.f32 %v871, 0.01
    %v876 = vsel %vm874, %v871, %v875
    %vm877 = vcmask 31744
    %v878 = vsel %vm877, %v876, -inf
    %879 = vmax.xlane.f32.xlu0 %v878
    %v880 = vpop.xlane.xlu0 %879
    %v881 = vsub.f32 %v876, %v880
    %v882 = vmul.f32 %v881, 1.442695
    %v883 = vpow.pop %v882
    %v884 = vsel %vm877, %v883, 0.0
    %885 = vadd.xlane.f32.xlu0 %v884
    %v886 = vpop.xlane.xlu0 %885
    %v887 = vrcp.pop %v886
    %v888 = vmul.f32 %v883, %v887
    %vm889 = vcmask 64544
    %v890 = vsel %vm889, %v876, -inf
    %891 = vmax.xlane.f32.xlu0 %v890
    %v892 = vpop.xlane.xlu0 %891
    %v893 = vsub.f32 %v876, %v892
    %v894 = vmul.f32 %v893, 1.442695
    %v895 = vpow.pop %v894
    %897 = vrot.lane.b32.xlu0 %v895, 124
    %v898 = vpop.permute.xlu0 %897
    %v900 = vsel %vm877, %v898, 0.0
    %901 = vadd.xlane.f32.xlu0 %v900
    %v902 = vpop.xlane.xlu0 %901
    %v903 = vrcp.pop %v902
    %v904 = vmul.f32 %v895, %v903
    %v905 = vsel %vm877, %v888, %v904
    %v906 = vld [vmem:[%s9] sm:$0xff]
    %v907 = vld [vmem:[%s9 + $0x8] sm:$0xff]
    %v908 = vld [vmem:[%s9 + $0x10] sm:$0xff]
    %v909 = vld [vmem:[%s9 + $0x18] sm:$0xff]
    %v911 = vsel %vm800, %v905, 0
    %913 = vmatprep.subr.mxu0 %v907
    %914 = vmatpush1.msra.mxu0 %v906
    %915 = vmatprep.subr.mxu0 0.0
    %916 = vmatpush1.msra.mxu0 0.0
    %917 = vmatprep.subr.mxu0 0.0
    %918 = vmatpush1.msra.mxu0 0.0
    %919 = vmatprep.subr.mxu0 0.0
    %920 = vmatpush1.msra.mxu0 0.0
    %921 = vmatprep.subr.mxu0 0.0
    %922 = vmatpush1.msra.mxu0 0.0
    %923 = vmatprep.subr.mxu0 0.0
    %924 = vmatpush1.msra.mxu0 0.0
    %925 = vmatprep.subr.mxu0 0.0
    %926 = vmatpush1.msra.mxu0 0.0
    %927 = vmatprep.subr.mxu0 0.0
    %928 = vmatpush1.msra.mxu0 0.0
    %929 = vmatprep.subr.mxu0 0.0
    %930 = vmatpush1.msra.mxu0 0.0
    %931 = vmatprep.subr.mxu0 0.0
    %932 = vmatpush1.msra.mxu0 0.0
    %933 = vmatprep.subr.mxu0 0.0
    %934 = vmatpush1.msra.mxu0 0.0
    %935 = vmatprep.subr.mxu0 0.0
    %936 = vmatpush1.msra.mxu0 0.0
    %937 = vmatprep.subr.mxu0 0.0
    %938 = vmatpush1.msra.mxu0 0.0
    %939 = vmatprep.subr.mxu0 0.0
    %940 = vmatpush1.msra.mxu0 0.0
    %941 = vmatprep.subr.mxu0 0.0
    %942 = vmatpush1.msra.mxu0 0.0
    %943 = vmatprep.subr.mxu0 0.0
    %944 = vmatpush1.msra.mxu0 0.0
    %945 = vmatprep.subr.mxu0 0.0
    %946 = vmatpush1.msra.mxu0 0.0
    %947 = vmatprep.subr.mxu0 0.0
    %948 = vmatpush1.msra.mxu0 0.0
    %949 = vmatprep.subr.mxu0 0.0
    %950 = vmatpush1.msra.mxu0 0.0
    %951 = vmatprep.subr.mxu0 0.0
    %952 = vmatpush1.msra.mxu0 0.0
    %953 = vmatprep.subr.mxu0 0.0
    %954 = vmatpush1.msra.mxu0 0.0
    %955 = vmatprep.subr.mxu0 0.0
    %956 = vmatpush1.msra.mxu0 0.0
    %957 = vmatprep.subr.mxu0 0.0
    %958 = vmatpush1.msra.mxu0 0.0
    %959 = vmatprep.subr.mxu0 0.0
    %960 = vmatpush1.msra.mxu0 0.0
    %961 = vmatprep.subr.mxu0 0.0
    %962 = vmatpush1.msra.mxu0 0.0
    %963 = vmatprep.subr.mxu0 0.0
    %964 = vmatpush1.msra.mxu0 0.0
    %965 = vmatprep.subr.mxu0 0.0
    %966 = vmatpush1.msra.mxu0 0.0
    %967 = vmatprep.subr.mxu0 0.0
    %968 = vmatpush1.msra.mxu0 0.0
    %969 = vmatprep.subr.mxu0 0.0
    %970 = vmatpush1.msra.mxu0 0.0
    %971 = vmatprep.subr.mxu0 0.0
    %972 = vmatpush1.msra.mxu0 0.0
    %973 = vmatprep.subr.mxu0 0.0
    %974 = vmatpush1.msra.mxu0 0.0
    %975 = vmatprep.subr.mxu0 0.0
    %976 = vmatpush1.msra.mxu0 0.0
    %977 = vmatprep.mubr.f32.mxu0 0.0
    %978 = vmatmul.mubr.f32.gmra.mrb[0].mxu0 %v911
    %v979 = vpop.f32.mrb[0].mxu0
    %v980 = vadd.f32 0.0, %v979
    %v981 = vpop.f32.mrb[0].mxu0
    %v982 = vadd.f32 0.0, %v981
    %983 = vdwg.mxu0
    %984 = vmatprep.subr.mxu0 %v909
    %985 = vmatpush1.msra.mxu0 %v908
    %986 = vmatprep.subr.mxu0 0.0
    %987 = vmatpush1.msra.mxu0 0.0
    %988 = vmatprep.subr.mxu0 0.0
    %989 = vmatpush1.msra.mxu0 0.0
    %990 = vmatprep.subr.mxu0 0.0
    %991 = vmatpush1.msra.mxu0 0.0
    %992 = vmatprep.subr.mxu0 0.0
    %993 = vmatpush1.msra.mxu0 0.0
    %994 = vmatprep.subr.mxu0 0.0
    %995 = vmatpush1.msra.mxu0 0.0
    %996 = vmatprep.subr.mxu0 0.0
    %997 = vmatpush1.msra.mxu0 0.0
    %998 = vmatprep.subr.mxu0 0.0
    %999 = vmatpush1.msra.mxu0 0.0
    %1000 = vmatprep.subr.mxu0 0.0
    %1001 = vmatpush1.msra.mxu0 0.0
    %1002 = vmatprep.subr.mxu0 0.0
    %1003 = vmatpush1.msra.mxu0 0.0
    %1004 = vmatprep.subr.mxu0 0.0
    %1005 = vmatpush1.msra.mxu0 0.0
    %1006 = vmatprep.subr.mxu0 0.0
    %1007 = vmatpush1.msra.mxu0 0.0
    %1008 = vmatprep.subr.mxu0 0.0
    %1009 = vmatpush1.msra.mxu0 0.0
    %1010 = vmatprep.subr.mxu0 0.0
    %1011 = vmatpush1.msra.mxu0 0.0
    %1012 = vmatprep.subr.mxu0 0.0
    %1013 = vmatpush1.msra.mxu0 0.0
    %1014 = vmatprep.subr.mxu0 0.0
    %1015 = vmatpush1.msra.mxu0 0.0
    %1016 = vmatprep.subr.mxu0 0.0
    %1017 = vmatpush1.msra.mxu0 0.0
    %1018 = vmatprep.subr.mxu0 0.0
    %1019 = vmatpush1.msra.mxu0 0.0
    %1020 = vmatprep.subr.mxu0 0.0
    %1021 = vmatpush1.msra.mxu0 0.0
    %1022 = vmatprep.subr.mxu0 0.0
    %1023 = vmatpush1.msra.mxu0 0.0
    %1024 = vmatprep.subr.mxu0 0.0
    %1025 = vmatpush1.msra.mxu0 0.0
    %1026 = vmatprep.subr.mxu0 0.0
    %1027 = vmatpush1.msra.mxu0 0.0
    %1028 = vmatprep.subr.mxu0 0.0
    %1029 = vmatpush1.msra.mxu0 0.0
    %1030 = vmatprep.subr.mxu0 0.0
    %1031 = vmatpush1.msra.mxu0 0.0
    %1032 = vmatprep.subr.mxu0 0.0
    %1033 = vmatpush1.msra.mxu0 0.0
    %1034 = vmatprep.subr.mxu0 0.0
    %1035 = vmatpush1.msra.mxu0 0.0
    %1036 = vmatprep.subr.mxu0 0.0
    %1037 = vmatpush1.msra.mxu0 0.0
    %1038 = vmatprep.subr.mxu0 0.0
    %1039 = vmatpush1.msra.mxu0 0.0
    %1040 = vmatprep.subr.mxu0 0.0
    %1041 = vmatpush1.msra.mxu0 0.0
    %1042 = vmatprep.subr.mxu0 0.0
    %1043 = vmatpush1.msra.mxu0 0.0
    %1044 = vmatprep.subr.mxu0 0.0
    %1045 = vmatpush1.msra.mxu0 0.0
    %1046 = vmatprep.subr.mxu0 0.0
    %1047 = vmatpush1.msra.mxu0 0.0
    %1048 = vmatprep.mubr.f32.mxu0 0.0
    %1049 = vmatmul.mubr.f32.gmra.mrb[0].mxu0 %v911
    %v1050 = vpop.f32.mrb[0].mxu0
    %v1051 = vadd.f32 0.0, %v1050
    %v1052 = vpop.f32.mrb[0].mxu0
    %v1053 = vadd.f32 0.0, %v1052
    %1054 = vdwg.mxu0
    %v1055 = vmul.f32 %v980, %v790
    %v1056 = vmul.f32 %v982, %v791
    %v1057 = vmul.f32 %v1051, %v790
    %v1058 = vmul.f32 %v1053, %v791
    %v1059 = vld [vmem:[%s10] sm:$0xff]
    %v1060 = vld [vmem:[%s10 + $0x8] sm:$0xff]
    %v1061 = vld [vmem:[%s10 + $0x10] sm:$0xff]
    %v1062 = vld [vmem:[%s10 + $0x18] sm:$0xff]
    %v1063 = vld [vmem:[%s10 + $0x20] sm:$0xff]
    %v1064 = vld [vmem:[%s10 + $0x28] sm:$0xff]
    %v1065 = vld [vmem:[%s10 + $0x30] sm:$0xff]
    %v1066 = vld [vmem:[%s10 + $0x38] sm:$0xff]
    %v1067 = vld [vmem:[%s10 + $0x40] sm:$0xff]
    %v1068 = vld [vmem:[%s10 + $0x48] sm:$0xff]
    %v1069 = vld [vmem:[%s10 + $0x50] sm:$0xff]
    %v1070 = vld [vmem:[%s10 + $0x58] sm:$0xff]
    %v1071 = vld [vmem:[%s10 + $0x60] sm:$0xff]
    %v1072 = vld [vmem:[%s10 + $0x68] sm:$0xff]
    %v1073 = vld [vmem:[%s10 + $0x70] sm:$0xff]
    %v1074 = vld [vmem:[%s10 + $0x78] sm:$0xff]
    %v1075 = vld [vmem:[%s10 + $0x80] sm:$0xff]
    %v1076 = vld [vmem:[%s10 + $0x88] sm:$0xff]
    %v1077 = vld [vmem:[%s10 + $0x90] sm:$0xff]
    %v1078 = vld [vmem:[%s10 + $0x98] sm:$0xff]
    %v1079 = vld [vmem:[%s10 + $0xa0] sm:$0xff]
    %v1080 = vld [vmem:[%s10 + $0xa8] sm:$0xff]
    %v1081 = vld [vmem:[%s10 + $0xb0] sm:$0xff]
    %v1082 = vld [vmem:[%s10 + $0xb8] sm:$0xff]
    %v1083 = vld [vmem:[%s10 + $0xc0] sm:$0xff]
    %v1084 = vld [vmem:[%s10 + $0xc8] sm:$0xff]
    %v1085 = vld [vmem:[%s10 + $0xd0] sm:$0xff]
    %v1086 = vld [vmem:[%s10 + $0xd8] sm:$0xff]
    %v1087 = vld [vmem:[%s10 + $0xe0] sm:$0xff]
    %v1088 = vld [vmem:[%s10 + $0xe8] sm:$0xff]
    %v1089 = vld [vmem:[%s10 + $0xf0] sm:$0xff]
    %v1090 = vld [vmem:[%s10 + $0xf8] sm:$0xff]
    %v1091 = vld [vmem:[%s10 + $0x100] sm:$0xff]
    %v1092 = vld [vmem:[%s10 + $0x108] sm:$0xff]
    %v1093 = vld [vmem:[%s10 + $0x110] sm:$0xff]
    %v1094 = vld [vmem:[%s10 + $0x118] sm:$0xff]
    %v1095 = vld [vmem:[%s10 + $0x120] sm:$0xff]
    %v1096 = vld [vmem:[%s10 + $0x128] sm:$0xff]
    %v1097 = vld [vmem:[%s10 + $0x130] sm:$0xff]
    %v1098 = vld [vmem:[%s10 + $0x138] sm:$0xff]
    %v1099 = vld [vmem:[%s10 + $0x140] sm:$0xff]
    %v1100 = vld [vmem:[%s10 + $0x148] sm:$0xff]
    %v1101 = vld [vmem:[%s10 + $0x150] sm:$0xff]
    %v1102 = vld [vmem:[%s10 + $0x158] sm:$0xff]
    %v1103 = vld [vmem:[%s10 + $0x160] sm:$0xff]
    %v1104 = vld [vmem:[%s10 + $0x168] sm:$0xff]
    %v1105 = vld [vmem:[%s10 + $0x170] sm:$0xff]
    %v1106 = vld [vmem:[%s10 + $0x178] sm:$0xff]
    %v1107 = vld [vmem:[%s10 + $0x180] sm:$0xff]
    %v1108 = vld [vmem:[%s10 + $0x188] sm:$0xff]
    %v1109 = vld [vmem:[%s10 + $0x190] sm:$0xff]
    %v1110 = vld [vmem:[%s10 + $0x198] sm:$0xff]
    %v1111 = vld [vmem:[%s10 + $0x1a0] sm:$0xff]
    %v1112 = vld [vmem:[%s10 + $0x1a8] sm:$0xff]
    %v1113 = vld [vmem:[%s10 + $0x1b0] sm:$0xff]
    %v1114 = vld [vmem:[%s10 + $0x1b8] sm:$0xff]
    %v1115 = vld [vmem:[%s10 + $0x1c0] sm:$0xff]
    %v1116 = vld [vmem:[%s10 + $0x1c8] sm:$0xff]
    %v1117 = vld [vmem:[%s10 + $0x1d0] sm:$0xff]
    %v1118 = vld [vmem:[%s10 + $0x1d8] sm:$0xff]
    %v1119 = vld [vmem:[%s10 + $0x1e0] sm:$0xff]
    %v1120 = vld [vmem:[%s10 + $0x1e8] sm:$0xff]
    %v1121 = vld [vmem:[%s10 + $0x1f0] sm:$0xff]
    %v1122 = vld [vmem:[%s10 + $0x1f8] sm:$0xff]
    %v1123 = vld [vmem:[%s11] sm:$0x1]
    %v1125 = vlaneseq
    %v1126 = vshrl.u32 %v1125, 7
    %v1127 = vsub.s32 0, %v1126
    %v1128 = vrot.slane %v1123, %v1127
    %1130 = vmatprep.subr.mxu0 0.0
    %1131 = vmatpush1.msra.mxu0 %v1059
    %1132 = vmatprep.subr.mxu0 0.0
    %1133 = vmatpush1.msra.mxu0 %v1060
    %1134 = vmatprep.subr.mxu0 0.0
    %1135 = vmatpush1.msra.mxu0 %v1061
    %1136 = vmatprep.subr.mxu0 0.0
    %1137 = vmatpush1.msra.mxu0 %v1062
    %1138 = vmatprep.subr.mxu0 0.0
    %1139 = vmatpush1.msra.mxu0 %v1063
    %1140 = vmatprep.subr.mxu0 0.0
    %1141 = vmatpush1.msra.mxu0 %v1064
    %1142 = vmatprep.subr.mxu0 0.0
    %1143 = vmatpush1.msra.mxu0 %v1065
    %1144 = vmatprep.subr.mxu0 0.0
    %1145 = vmatpush1.msra.mxu0 %v1066
    %1146 = vmatprep.subr.mxu0 0.0
    %1147 = vmatpush1.msra.mxu0 %v1067
    %1148 = vmatprep.subr.mxu0 0.0
    %1149 = vmatpush1.msra.mxu0 %v1068
    %1150 = vmatprep.subr.mxu0 0.0
    %1151 = vmatpush1.msra.mxu0 %v1069
    %1152 = vmatprep.subr.mxu0 0.0
    %1153 = vmatpush1.msra.mxu0 %v1070
    %1154 = vmatprep.subr.mxu0 0.0
    %1155 = vmatpush1.msra.mxu0 %v1071
    %1156 = vmatprep.subr.mxu0 0.0
    %1157 = vmatpush1.msra.mxu0 %v1072
    %1158 = vmatprep.subr.mxu0 0.0
    %1159 = vmatpush1.msra.mxu0 %v1073
    %1160 = vmatprep.subr.mxu0 0.0
    %1161 = vmatpush1.msra.mxu0 %v1074
    %1162 = vmatprep.subr.mxu0 0.0
    %1163 = vmatpush1.msra.mxu0 %v1075
    %1164 = vmatprep.subr.mxu0 0.0
    %1165 = vmatpush1.msra.mxu0 %v1076
    %1166 = vmatprep.subr.mxu0 0.0
    %1167 = vmatpush1.msra.mxu0 %v1077
    %1168 = vmatprep.subr.mxu0 0.0
    %1169 = vmatpush1.msra.mxu0 %v1078
    %1170 = vmatprep.subr.mxu0 0.0
    %1171 = vmatpush1.msra.mxu0 %v1079
    %1172 = vmatprep.subr.mxu0 0.0
    %1173 = vmatpush1.msra.mxu0 %v1080
    %1174 = vmatprep.subr.mxu0 0.0
    %1175 = vmatpush1.msra.mxu0 %v1081
    %1176 = vmatprep.subr.mxu0 0.0
    %1177 = vmatpush1.msra.mxu0 %v1082
    %1178 = vmatprep.subr.mxu0 0.0
    %1179 = vmatpush1.msra.mxu0 %v1083
    %1180 = vmatprep.subr.mxu0 0.0
    %1181 = vmatpush1.msra.mxu0 %v1084
    %1182 = vmatprep.subr.mxu0 0.0
    %1183 = vmatpush1.msra.mxu0 %v1085
    %1184 = vmatprep.subr.mxu0 0.0
    %1185 = vmatpush1.msra.mxu0 %v1086
    %1186 = vmatprep.subr.mxu0 0.0
    %1187 = vmatpush1.msra.mxu0 %v1087
    %1188 = vmatprep.subr.mxu0 0.0
    %1189 = vmatpush1.msra.mxu0 %v1088
    %1190 = vmatprep.subr.mxu0 0.0
    %1191 = vmatpush1.msra.mxu0 %v1089
    %1192 = vmatprep.subr.mxu0 0.0
    %1193 = vmatpush1.msra.mxu0 %v1090
    %1194 = vmatprep.mubr.f32.mxu0 %v1056
    %1195 = vmatmul.mubr.f32.gmra.mrb[0].mxu0 %v1055
    %v1196 = vpop.f32.mrb[0].mxu0
    %v1197 = vadd.f32 %v1128, %v1196
    %v1198 = vpop.f32.mrb[0].mxu0
    %1199 = vdwg.mxu0
    %1200 = vmatprep.subr.mxu0 0.0
    %1201 = vmatpush1.msra.mxu0 %v1091
    %1202 = vmatprep.subr.mxu0 0.0
    %1203 = vmatpush1.msra.mxu0 %v1092
    %1204 = vmatprep.subr.mxu0 0.0
    %1205 = vmatpush1.msra.mxu0 %v1093
    %1206 = vmatprep.subr.mxu0 0.0
    %1207 = vmatpush1.msra.mxu0 %v1094
    %1208 = vmatprep.subr.mxu0 0.0
    %1209 = vmatpush1.msra.mxu0 %v1095
    %1210 = vmatprep.subr.mxu0 0.0
    %1211 = vmatpush1.msra.mxu0 %v1096
    %1212 = vmatprep.subr.mxu0 0.0
    %1213 = vmatpush1.msra.mxu0 %v1097
    %1214 = vmatprep.subr.mxu0 0.0
    %1215 = vmatpush1.msra.mxu0 %v1098
    %1216 = vmatprep.subr.mxu0 0.0
    %1217 = vmatpush1.msra.mxu0 %v1099
    %1218 = vmatprep.subr.mxu0 0.0
    %1219 = vmatpush1.msra.mxu0 %v1100
    %1220 = vmatprep.subr.mxu0 0.0
    %1221 = vmatpush1.msra.mxu0 %v1101
    %1222 = vmatprep.subr.mxu0 0.0
    %1223 = vmatpush1.msra.mxu0 %v1102
    %1224 = vmatprep.subr.mxu0 0.0
    %1225 = vmatpush1.msra.mxu0 %v1103
    %1226 = vmatprep.subr.mxu0 0.0
    %1227 = vmatpush1.msra.mxu0 %v1104
    %1228 = vmatprep.subr.mxu0 0.0
    %1229 = vmatpush1.msra.mxu0 %v1105
    %1230 = vmatprep.subr.mxu0 0.0
    %1231 = vmatpush1.msra.mxu0 %v1106
    %1232 = vmatprep.subr.mxu0 0.0
    %1233 = vmatpush1.msra.mxu0 %v1107
    %1234 = vmatprep.subr.mxu0 0.0
    %1235 = vmatpush1.msra.mxu0 %v1108
    %1236 = vmatprep.subr.mxu0 0.0
    %1237 = vmatpush1.msra.mxu0 %v1109
    %1238 = vmatprep.subr.mxu0 0.0
    %1239 = vmatpush1.msra.mxu0 %v1110
    %1240 = vmatprep.subr.mxu0 0.0
    %1241 = vmatpush1.msra.mxu0 %v1111
    %1242 = vmatprep.subr.mxu0 0.0
    %1243 = vmatpush1.msra.mxu0 %v1112
    %1244 = vmatprep.subr.mxu0 0.0
    %1245 = vmatpush1.msra.mxu0 %v1113
    %1246 = vmatprep.subr.mxu0 0.0
    %1247 = vmatpush1.msra.mxu0 %v1114
    %1248 = vmatprep.subr.mxu0 0.0
    %1249 = vmatpush1.msra.mxu0 %v1115
    %1250 = vmatprep.subr.mxu0 0.0
    %1251 = vmatpush1.msra.mxu0 %v1116
    %1252 = vmatprep.subr.mxu0 0.0
    %1253 = vmatpush1.msra.mxu0 %v1117
    %1254 = vmatprep.subr.mxu0 0.0
    %1255 = vmatpush1.msra.mxu0 %v1118
    %1256 = vmatprep.subr.mxu0 0.0
    %1257 = vmatpush1.msra.mxu0 %v1119
    %1258 = vmatprep.subr.mxu0 0.0
    %1259 = vmatpush1.msra.mxu0 %v1120
    %1260 = vmatprep.subr.mxu0 0.0
    %1261 = vmatpush1.msra.mxu0 %v1121
    %1262 = vmatprep.subr.mxu0 0.0
    %1263 = vmatpush1.msra.mxu0 %v1122
    %1264 = vmatprep.mubr.f32.mxu0 %v1058
    %1265 = vmatmul.mubr.f32.gmra.mrb[0].mxu0 %v1057
    %v1266 = vpop.f32.mrb[0].mxu0
    %v1267 = vadd.f32 %v1197, %v1266
    %v1268 = vpop.f32.mrb[0].mxu0
    %1269 = vdwg.mxu0
    %1270 = vst.msk [vmem:[%s12] sm:$0xff] %vm800, %v1267
    // Predicated region
    $region54: #{mmoe_forward.3} parent=1 // pred_check
      _
    $region55: #{mmoe_forward.3} parent=1 // pred_check_branch
      %1272 = sbr.rel (0) target = $region57
    $region56: #{mmoe_forward.3} parent=1 // pred_region
      _
    $region57: #{mmoe_forward.3} parent=1 // pred_fallthru
      _
    // Predicated region
    $region58: #{mmoe_forward.3} parent=1 // pred_check
      _
    $region59: #{mmoe_forward.3} parent=1 // pred_check_branch
      %1274 = sbr.rel (0) target = $region61
    $region60: #{mmoe_forward.3} parent=1 // pred_region
      _
    $region61: #{mmoe_forward.3} parent=1 // pred_fallthru
      _
    %1275 = vsyncpa [#allocation3], 1

</llo_original>
